<compile_context>
chip_gen: v6e
topology: v6e:2x2x1
jax: 0.10.0
libtpu: 0.0.40
codegen_flags: <defaults>
</compile_context>

<pallas_src>
import functools

import jax
import jax.numpy as jnp
from jax import lax
from jax.experimental import pallas as pl
from jax.experimental.pallas import tpu as pltpu


def _msfe_kernel(x_ref, w_ref, b_ref, o_ref, p_ref, *, H, WP, Cout, NB, Cin_p):
    """Fused multi-scale conv (3x3 + 5x5 + 7x7, ReLU, sum) via one im2col matmul.

    x_ref: (NB, Cin_p, HPF*WP)  zero-padded inputs, (H, W) flattened on lanes
    w_ref: (3*Cout, 49*Cin_p)   lane-dense fused weights (tap-major, ch-minor)
    b_ref: (3*Cout, 1)          fused biases
    o_ref: (NB, Cout, H*WP)     lane-dense output (wrapper crops halo columns)
    p_ref: (49*Cin_p, H*WP)     VMEM scratch: im2col patch matrix
    """
    L = H * WP
    C3 = 3 * Cout

    w = w_ref[...]                    # (3*Cout, 49*Cin_p)
    b = b_ref[...]                    # (3*Cout, 1)

    for n in range(NB):
        x = x_ref[n]                  # (Cin_p, HPF*WP) — a handful of vregs

        # im2col: 49 tile-aligned (Cin_p=8 sublane x L lane) scratch stores.
        for kh in range(7):
            for kw in range(7):
                t = kh * 7 + kw
                off = kh * WP + kw
                p_ref[t * Cin_p:(t + 1) * Cin_p, :] = x[:, off:off + L]

        # One K = 49*Cin_p matmul into a lane-dense (3*Cout, L) accumulator.
        acc = jnp.dot(w, p_ref[...], preferred_element_type=jnp.float32)
        acc = acc + b                 # lane-broadcast bias

        # Per-conv 8-sublane-aligned slices: ReLU each, then sum.
        out = (jnp.maximum(acc[0 * Cout:1 * Cout], 0.0)
               + jnp.maximum(acc[1 * Cout:2 * Cout], 0.0)
               + jnp.maximum(acc[2 * Cout:3 * Cout], 0.0))
        o_ref[n] = out.astype(o_ref.dtype)


def prepare_params(params, cin_pad=None):
    """Fuse the three convs' weights once (hoisted out of the per-call path).

    params: (w3, b3, w5, b5, w7, b7) with weights in HWIO (kh, kw, Cin, Cout).
    Returns:
      w_fused: (3*Cout, 49*cin_pad) — 3x3/5x5 zero-embedded into 7x7 frames,
               concatenated along Cout, laid out tap-major / channel-minor.
      b_fused: (3*Cout, 1)
    """
    w3, b3, w5, b5, w7, b7 = params
    Cin, Cout = w3.shape[2], w3.shape[3]
    if cin_pad is None:
        cin_pad = max(8, -(-Cin // 8) * 8)   # round Cin up to a sublane tile

    def embed(w, k):
        p = 3 - k // 2                      # matches per-conv "same" padding
        return jnp.pad(w, ((p, p), (p, p), (0, 0), (0, 0)))

    w_cat = jnp.concatenate([embed(w3, 3), embed(w5, 5), embed(w7, 7)],
                            axis=-1)                          # (7,7,Cin,3C)
    w_cat = jnp.pad(w_cat, ((0, 0), (0, 0), (0, cin_pad - Cin), (0, 0)))
    w_fused = jnp.transpose(w_cat, (3, 0, 1, 2)).reshape(3 * Cout,
                                                         49 * cin_pad)
    b_fused = jnp.concatenate([b3, b5, b7]).reshape(3 * Cout, 1)
    return w_fused, b_fused


def _batch_block(n_batch):
    """Fold the batch into one grid step on single-TC chips (v5e/v6e); keep a
    >=2-wide parallel grid everywhere else (v7x has 2 TensorCores)."""
    try:
        kind = jax.devices()[0].device_kind.lower()
    except Exception:
        return 1
    if any(s in kind for s in ("v5e", "v5 lite", "v5lite",
                               "v6e", "v6 lite", "v6lite")):
        return n_batch
    return 1


@jax.jit
def multi_scale_feature_extractor(x_nchw, w_fused, b_fused):
    """x_nchw: (N, Cin, H, W) float32.  Returns (N, Cout, H, W) (NCHW)."""
    N, Cin, H, W = x_nchw.shape
    C3 = w_fused.shape[0]
    Cout = C3 // 3
    Cin_p = w_fused.shape[1] // 49

    # Row stride: >= W + 6 (7x7 halo); pad a couple more columns if that makes
    # the flat spatial extent a multiple of 128 lanes (unmasked vst).
    WP = W + 6
    for cand in range(W + 6, W + 6 + 32):
        if (H * cand) % 128 == 0:
            WP = cand
            break
    HPF = H + 7          # 3-row halo top, 3 bottom, +1 slack row so the last
                         # flat tap slice (offset 6*WP+6) stays in bounds
    FP = HPF * WP
    L = H * WP

    NB = _batch_block(N)
    if N % NB:
        NB = 1

    # Single pad HLO (zero channels up to Cin_p + spatial halo), then a free
    # contiguous reshape that puts (H, W) on the lane axis.  No transposes.
    x_pad = jnp.pad(x_nchw, ((0, 0), (0, Cin_p - Cin),
                             (3, HPF - 3 - H), (3, WP - 3 - W)))
    x_flat = x_pad.reshape(N, Cin_p, FP)

    kernel = functools.partial(_msfe_kernel, H=H, WP=WP, Cout=Cout,
                               NB=NB, Cin_p=Cin_p)

    out_flat = pl.pallas_call(
        kernel,
        out_shape=jax.ShapeDtypeStruct((N, Cout, L), x_nchw.dtype),
        grid_spec=pltpu.PrefetchScalarGridSpec(
            num_scalar_prefetch=0,
            grid=(N // NB,),
            in_specs=[
                pl.BlockSpec((NB, Cin_p, FP), lambda b: (b, 0, 0)),
                pl.BlockSpec((C3, 49 * Cin_p), lambda b: (0, 0)),
                pl.BlockSpec((C3, 1), lambda b: (0, 0)),
            ],
            out_specs=pl.BlockSpec((NB, Cout, L), lambda b: (b, 0, 0)),
            scratch_shapes=[pltpu.VMEM((49 * Cin_p, L), jnp.float32)],
        ),
        compiler_params=pltpu.CompilerParams(
            dimension_semantics=("parallel",)),
    )(x_flat, w_fused, b_fused)

    # Free contiguous reshape, then crop the garbage halo columns per row.
    return out_flat.reshape(N, Cout, H, WP)[:, :, :, :W]


def _make_params(key, in_channel, out_channel):
    """Deterministic weights, roughly Conv2d default (kaiming-uniform-ish).

    Stored in HWIO layout: (kh, kw, Cin, Cout)."""
    params = []
    for i, k in enumerate((3, 5, 7)):
        kw_key, kb_key = jax.random.split(jax.random.fold_in(key, i))
        fan_in = in_channel * k * k
        bound = 1.0 / jnp.sqrt(fan_in)
        w = jax.random.uniform(kw_key, (k, k, in_channel, out_channel),
                               jnp.float32, -bound, bound)
        b = jax.random.uniform(kb_key, (out_channel,), jnp.float32,
                               -bound, bound)
        params += [w, b]
    return tuple(params)


def _reference(x_nchw, params):
    """Pure-JAX reference using lax.conv_general_dilated (NCHW semantics)."""
    w3, b3, w5, b5, w7, b7 = params
    out = None
    for w, b, pad in ((w3, b3, 1), (w5, b5, 2), (w7, b7, 3)):
        y = lax.conv_general_dilated(
            x_nchw, w, window_strides=(1, 1),
            padding=[(pad, pad), (pad, pad)],
            dimension_numbers=("NCHW", "HWIO", "NCHW"))
        y = jnp.maximum(y + b[None, :, None, None], 0.0)
        out = y if out is None else out + y
    return out


if __name__ == "__main__":
    key = jax.random.PRNGKey(0)
    x_key, p_key = jax.random.split(key)

    N, Cin, Cout, H, W = 2, 4, 8, 16, 16
    x = jax.random.normal(x_key, (N, Cin, H, W), jnp.float32)
    params = _make_params(p_key, Cin, Cout)

    # Weight fusion hoisted out of the per-call path (done once).
    w_fused, b_fused = prepare_params(params)

    out = multi_scale_feature_extractor(x, w_fused, b_fused)
    out = jax.block_until_ready(out)

    ref = jax.block_until_ready(_reference(x, params))
    assert out.shape == (N, Cout, H, W)
    assert jnp.allclose(out, ref, atol=1e-4, rtol=1e-4), \
        float(jnp.max(jnp.abs(out - ref)))

    print("KERNEL_OK")
</pallas_src>

<mosaic_0001>
module attributes {stable_mosaic.version = 11 : i64} {
  func.func @_msfe_kernel(%arg0: i32, %arg1: memref<1x8x552xf32, #tpu.memory_space<vmem>>, %arg2: memref<24x392xf32, #tpu.memory_space<vmem>>, %arg3: memref<24x1xf32, #tpu.memory_space<vmem>>, %arg4: memref<1x8x384xf32, #tpu.memory_space<vmem>>, %arg5: memref<392x384xf32, #tpu.memory_space<vmem>>) attributes {dimension_semantics = [#tpu.dimension_semantics<parallel>], iteration_bounds = array<i64: 2>, scalar_prefetch = 0 : i64, scratch_operands = 1 : i64, tpu.core_type = #tpu.core_type<tc>, window_params = [{transform_indices = @transform_0, window_bounds = array<i64: 1, 8, 552>}, {pipeline_mode = #tpu.pipeline_mode<synchronous>, transform_indices = @transform_1, window_bounds = array<i64: 24, 392>}, {pipeline_mode = #tpu.pipeline_mode<synchronous>, transform_indices = @transform_2, window_bounds = array<i64: 24, 1>}, {transform_indices = @transform_3, window_bounds = array<i64: 1, 8, 384>}]} {
    %c0 = arith.constant 0 : index
    %c0_0 = arith.constant 0 : index
    %0 = vector.load %arg2[%c0, %c0_0] : memref<24x392xf32, #tpu.memory_space<vmem>>, vector<24x392xf32>
    %c0_1 = arith.constant 0 : index
    %c0_2 = arith.constant 0 : index
    %1 = vector.load %arg3[%c0_1, %c0_2] : memref<24x1xf32, #tpu.memory_space<vmem>>, vector<24x1xf32>
    %c0_3 = arith.constant 0 : index
    %c0_4 = arith.constant 0 : index
    %c0_5 = arith.constant 0 : index
    %2 = vector.load %arg1[%c0_3, %c0_4, %c0_5] : memref<1x8x552xf32, #tpu.memory_space<vmem>>, vector<1x8x552xf32>
    %3 = vector.shape_cast %2 : vector<1x8x552xf32> to vector<8x552xf32>
    %4 = vector.extract_strided_slice %3 {offsets = [0, 0], sizes = [8, 384], strides = [1, 1]} : vector<8x552xf32> to vector<8x384xf32>
    %c0_6 = arith.constant 0 : index
    %c0_7 = arith.constant 0 : index
    %5 = vector.load %arg5[%c0_6, %c0_7] : memref<392x384xf32, #tpu.memory_space<vmem>>, vector<8x384xf32>
    tpu.vector_store %arg5[%c0_6, %c0_7], %4 {strides = array<i32>} : memref<392x384xf32, #tpu.memory_space<vmem>>, vector<8x384xf32>,
    %6 = vector.extract_strided_slice %3 {offsets = [0, 1], sizes = [8, 384], strides = [1, 1]} : vector<8x552xf32> to vector<8x384xf32>
    %c8 = arith.constant 8 : index
    %c0_8 = arith.constant 0 : index
    %7 = vector.load %arg5[%c8, %c0_8] : memref<392x384xf32, #tpu.memory_space<vmem>>, vector<8x384xf32>
    tpu.vector_store %arg5[%c8, %c0_8], %6 {strides = array<i32>} : memref<392x384xf32, #tpu.memory_space<vmem>>, vector<8x384xf32>,
    %8 = vector.extract_strided_slice %3 {offsets = [0, 2], sizes = [8, 384], strides = [1, 1]} : vector<8x552xf32> to vector<8x384xf32>
    %c16 = arith.constant 16 : index
    %c0_9 = arith.constant 0 : index
    %9 = vector.load %arg5[%c16, %c0_9] : memref<392x384xf32, #tpu.memory_space<vmem>>, vector<8x384xf32>
    tpu.vector_store %arg5[%c16, %c0_9], %8 {strides = array<i32>} : memref<392x384xf32, #tpu.memory_space<vmem>>, vector<8x384xf32>,
    %10 = vector.extract_strided_slice %3 {offsets = [0, 3], sizes = [8, 384], strides = [1, 1]} : vector<8x552xf32> to vector<8x384xf32>
    %c24 = arith.constant 24 : index
    %c0_10 = arith.constant 0 : index
    %11 = vector.load %arg5[%c24, %c0_10] : memref<392x384xf32, #tpu.memory_space<vmem>>, vector<8x384xf32>
    tpu.vector_store %arg5[%c24, %c0_10], %10 {strides = array<i32>} : memref<392x384xf32, #tpu.memory_space<vmem>>, vector<8x384xf32>,
    %12 = vector.extract_strided_slice %3 {offsets = [0, 4], sizes = [8, 384], strides = [1, 1]} : vector<8x552xf32> to vector<8x384xf32>
    %c32 = arith.constant 32 : index
    %c0_11 = arith.constant 0 : index
    %13 = vector.load %arg5[%c32, %c0_11] : memref<392x384xf32, #tpu.memory_space<vmem>>, vector<8x384xf32>
    tpu.vector_store %arg5[%c32, %c0_11], %12 {strides = array<i32>} : memref<392x384xf32, #tpu.memory_space<vmem>>, vector<8x384xf32>,
    %14 = vector.extract_strided_slice %3 {offsets = [0, 5], sizes = [8, 384], strides = [1, 1]} : vector<8x552xf32> to vector<8x384xf32>
    %c40 = arith.constant 40 : index
    %c0_12 = arith.constant 0 : index
    %15 = vector.load %arg5[%c40, %c0_12] : memref<392x384xf32, #tpu.memory_space<vmem>>, vector<8x384xf32>
    tpu.vector_store %arg5[%c40, %c0_12], %14 {strides = array<i32>} : memref<392x384xf32, #tpu.memory_space<vmem>>, vector<8x384xf32>,
    %16 = vector.extract_strided_slice %3 {offsets = [0, 6], sizes = [8, 384], strides = [1, 1]} : vector<8x552xf32> to vector<8x384xf32>
    %c48 = arith.constant 48 : index
    %c0_13 = arith.constant 0 : index
    %17 = vector.load %arg5[%c48, %c0_13] : memref<392x384xf32, #tpu.memory_space<vmem>>, vector<8x384xf32>
    tpu.vector_store %arg5[%c48, %c0_13], %16 {strides = array<i32>} : memref<392x384xf32, #tpu.memory_space<vmem>>, vector<8x384xf32>,
    %18 = vector.extract_strided_slice %3 {offsets = [0, 24], sizes = [8, 384], strides = [1, 1]} : vector<8x552xf32> to vector<8x384xf32>
    %c56 = arith.constant 56 : index
    %c0_14 = arith.constant 0 : index
    %19 = vector.load %arg5[%c56, %c0_14] : memref<392x384xf32, #tpu.memory_space<vmem>>, vector<8x384xf32>
    tpu.vector_store %arg5[%c56, %c0_14], %18 {strides = array<i32>} : memref<392x384xf32, #tpu.memory_space<vmem>>, vector<8x384xf32>,
    %20 = vector.extract_strided_slice %3 {offsets = [0, 25], sizes = [8, 384], strides = [1, 1]} : vector<8x552xf32> to vector<8x384xf32>
    %c64 = arith.constant 64 : index
    %c0_15 = arith.constant 0 : index
    %21 = vector.load %arg5[%c64, %c0_15] : memref<392x384xf32, #tpu.memory_space<vmem>>, vector<8x384xf32>
    tpu.vector_store %arg5[%c64, %c0_15], %20 {strides = array<i32>} : memref<392x384xf32, #tpu.memory_space<vmem>>, vector<8x384xf32>,
    %22 = vector.extract_strided_slice %3 {offsets = [0, 26], sizes = [8, 384], strides = [1, 1]} : vector<8x552xf32> to vector<8x384xf32>
    %c72 = arith.constant 72 : index
    %c0_16 = arith.constant 0 : index
    %23 = vector.load %arg5[%c72, %c0_16] : memref<392x384xf32, #tpu.memory_space<vmem>>, vector<8x384xf32>
    tpu.vector_store %arg5[%c72, %c0_16], %22 {strides = array<i32>} : memref<392x384xf32, #tpu.memory_space<vmem>>, vector<8x384xf32>,
    %24 = vector.extract_strided_slice %3 {offsets = [0, 27], sizes = [8, 384], strides = [1, 1]} : vector<8x552xf32> to vector<8x384xf32>
    %c80 = arith.constant 80 : index
    %c0_17 = arith.constant 0 : index
    %25 = vector.load %arg5[%c80, %c0_17] : memref<392x384xf32, #tpu.memory_space<vmem>>, vector<8x384xf32>
    tpu.vector_store %arg5[%c80, %c0_17], %24 {strides = array<i32>} : memref<392x384xf32, #tpu.memory_space<vmem>>, vector<8x384xf32>,
    %26 = vector.extract_strided_slice %3 {offsets = [0, 28], sizes = [8, 384], strides = [1, 1]} : vector<8x552xf32> to vector<8x384xf32>
    %c88 = arith.constant 88 : index
    %c0_18 = arith.constant 0 : index
    %27 = vector.load %arg5[%c88, %c0_18] : memref<392x384xf32, #tpu.memory_space<vmem>>, vector<8x384xf32>
    tpu.vector_store %arg5[%c88, %c0_18], %26 {strides = array<i32>} : memref<392x384xf32, #tpu.memory_space<vmem>>, vector<8x384xf32>,
    %28 = vector.extract_strided_slice %3 {offsets = [0, 29], sizes = [8, 384], strides = [1, 1]} : vector<8x552xf32> to vector<8x384xf32>
    %c96 = arith.constant 96 : index
    %c0_19 = arith.constant 0 : index
    %29 = vector.load %arg5[%c96, %c0_19] : memref<392x384xf32, #tpu.memory_space<vmem>>, vector<8x384xf32>
    tpu.vector_store %arg5[%c96, %c0_19], %28 {strides = array<i32>} : memref<392x384xf32, #tpu.memory_space<vmem>>, vector<8x384xf32>,
    %30 = vector.extract_strided_slice %3 {offsets = [0, 30], sizes = [8, 384], strides = [1, 1]} : vector<8x552xf32> to vector<8x384xf32>
    %c104 = arith.constant 104 : index
    %c0_20 = arith.constant 0 : index
    %31 = vector.load %arg5[%c104, %c0_20] : memref<392x384xf32, #tpu.memory_space<vmem>>, vector<8x384xf32>
    tpu.vector_store %arg5[%c104, %c0_20], %30 {strides = array<i32>} : memref<392x384xf32, #tpu.memory_space<vmem>>, vector<8x384xf32>,
    %32 = vector.extract_strided_slice %3 {offsets = [0, 48], sizes = [8, 384], strides = [1, 1]} : vector<8x552xf32> to vector<8x384xf32>
    %c112 = arith.constant 112 : index
    %c0_21 = arith.constant 0 : index
    %33 = vector.load %arg5[%c112, %c0_21] : memref<392x384xf32, #tpu.memory_space<vmem>>, vector<8x384xf32>
    tpu.vector_store %arg5[%c112, %c0_21], %32 {strides = array<i32>} : memref<392x384xf32, #tpu.memory_space<vmem>>, vector<8x384xf32>,
    %34 = vector.extract_strided_slice %3 {offsets = [0, 49], sizes = [8, 384], strides = [1, 1]} : vector<8x552xf32> to vector<8x384xf32>
    %c120 = arith.constant 120 : index
    %c0_22 = arith.constant 0 : index
    %35 = vector.load %arg5[%c120, %c0_22] : memref<392x384xf32, #tpu.memory_space<vmem>>, vector<8x384xf32>
    tpu.vector_store %arg5[%c120, %c0_22], %34 {strides = array<i32>} : memref<392x384xf32, #tpu.memory_space<vmem>>, vector<8x384xf32>,
    %36 = vector.extract_strided_slice %3 {offsets = [0, 50], sizes = [8, 384], strides = [1, 1]} : vector<8x552xf32> to vector<8x384xf32>
    %c128 = arith.constant 128 : index
    %c0_23 = arith.constant 0 : index
    %37 = vector.load %arg5[%c128, %c0_23] : memref<392x384xf32, #tpu.memory_space<vmem>>, vector<8x384xf32>
    tpu.vector_store %arg5[%c128, %c0_23], %36 {strides = array<i32>} : memref<392x384xf32, #tpu.memory_space<vmem>>, vector<8x384xf32>,
    %38 = vector.extract_strided_slice %3 {offsets = [0, 51], sizes = [8, 384], strides = [1, 1]} : vector<8x552xf32> to vector<8x384xf32>
    %c136 = arith.constant 136 : index
    %c0_24 = arith.constant 0 : index
    %39 = vector.load %arg5[%c136, %c0_24] : memref<392x384xf32, #tpu.memory_space<vmem>>, vector<8x384xf32>
    tpu.vector_store %arg5[%c136, %c0_24], %38 {strides = array<i32>} : memref<392x384xf32, #tpu.memory_space<vmem>>, vector<8x384xf32>,
    %40 = vector.extract_strided_slice %3 {offsets = [0, 52], sizes = [8, 384], strides = [1, 1]} : vector<8x552xf32> to vector<8x384xf32>
    %c144 = arith.constant 144 : index
    %c0_25 = arith.constant 0 : index
    %41 = vector.load %arg5[%c144, %c0_25] : memref<392x384xf32, #tpu.memory_space<vmem>>, vector<8x384xf32>
    tpu.vector_store %arg5[%c144, %c0_25], %40 {strides = array<i32>} : memref<392x384xf32, #tpu.memory_space<vmem>>, vector<8x384xf32>,
    %42 = vector.extract_strided_slice %3 {offsets = [0, 53], sizes = [8, 384], strides = [1, 1]} : vector<8x552xf32> to vector<8x384xf32>
    %c152 = arith.constant 152 : index
    %c0_26 = arith.constant 0 : index
    %43 = vector.load %arg5[%c152, %c0_26] : memref<392x384xf32, #tpu.memory_space<vmem>>, vector<8x384xf32>
    tpu.vector_store %arg5[%c152, %c0_26], %42 {strides = array<i32>} : memref<392x384xf32, #tpu.memory_space<vmem>>, vector<8x384xf32>,
    %44 = vector.extract_strided_slice %3 {offsets = [0, 54], sizes = [8, 384], strides = [1, 1]} : vector<8x552xf32> to vector<8x384xf32>
    %c160 = arith.constant 160 : index
    %c0_27 = arith.constant 0 : index
    %45 = vector.load %arg5[%c160, %c0_27] : memref<392x384xf32, #tpu.memory_space<vmem>>, vector<8x384xf32>
    tpu.vector_store %arg5[%c160, %c0_27], %44 {strides = array<i32>} : memref<392x384xf32, #tpu.memory_space<vmem>>, vector<8x384xf32>,
    %46 = vector.extract_strided_slice %3 {offsets = [0, 72], sizes = [8, 384], strides = [1, 1]} : vector<8x552xf32> to vector<8x384xf32>
    %c168 = arith.constant 168 : index
    %c0_28 = arith.constant 0 : index
    %47 = vector.load %arg5[%c168, %c0_28] : memref<392x384xf32, #tpu.memory_space<vmem>>, vector<8x384xf32>
    tpu.vector_store %arg5[%c168, %c0_28], %46 {strides = array<i32>} : memref<392x384xf32, #tpu.memory_space<vmem>>, vector<8x384xf32>,
    %48 = vector.extract_strided_slice %3 {offsets = [0, 73], sizes = [8, 384], strides = [1, 1]} : vector<8x552xf32> to vector<8x384xf32>
    %c176 = arith.constant 176 : index
    %c0_29 = arith.constant 0 : index
    %49 = vector.load %arg5[%c176, %c0_29] : memref<392x384xf32, #tpu.memory_space<vmem>>, vector<8x384xf32>
    tpu.vector_store %arg5[%c176, %c0_29], %48 {strides = array<i32>} : memref<392x384xf32, #tpu.memory_space<vmem>>, vector<8x384xf32>,
    %50 = vector.extract_strided_slice %3 {offsets = [0, 74], sizes = [8, 384], strides = [1, 1]} : vector<8x552xf32> to vector<8x384xf32>
    %c184 = arith.constant 184 : index
    %c0_30 = arith.constant 0 : index
    %51 = vector.load %arg5[%c184, %c0_30] : memref<392x384xf32, #tpu.memory_space<vmem>>, vector<8x384xf32>
    tpu.vector_store %arg5[%c184, %c0_30], %50 {strides = array<i32>} : memref<392x384xf32, #tpu.memory_space<vmem>>, vector<8x384xf32>,
    %52 = vector.extract_strided_slice %3 {offsets = [0, 75], sizes = [8, 384], strides = [1, 1]} : vector<8x552xf32> to vector<8x384xf32>
    %c192 = arith.constant 192 : index
    %c0_31 = arith.constant 0 : index
    %53 = vector.load %arg5[%c192, %c0_31] : memref<392x384xf32, #tpu.memory_space<vmem>>, vector<8x384xf32>
    tpu.vector_store %arg5[%c192, %c0_31], %52 {strides = array<i32>} : memref<392x384xf32, #tpu.memory_space<vmem>>, vector<8x384xf32>,
    %54 = vector.extract_strided_slice %3 {offsets = [0, 76], sizes = [8, 384], strides = [1, 1]} : vector<8x552xf32> to vector<8x384xf32>
    %c200 = arith.constant 200 : index
    %c0_32 = arith.constant 0 : index
    %55 = vector.load %arg5[%c200, %c0_32] : memref<392x384xf32, #tpu.memory_space<vmem>>, vector<8x384xf32>
    tpu.vector_store %arg5[%c200, %c0_32], %54 {strides = array<i32>} : memref<392x384xf32, #tpu.memory_space<vmem>>, vector<8x384xf32>,
    %56 = vector.extract_strided_slice %3 {offsets = [0, 77], sizes = [8, 384], strides = [1, 1]} : vector<8x552xf32> to vector<8x384xf32>
    %c208 = arith.constant 208 : index
    %c0_33 = arith.constant 0 : index
    %57 = vector.load %arg5[%c208, %c0_33] : memref<392x384xf32, #tpu.memory_space<vmem>>, vector<8x384xf32>
    tpu.vector_store %arg5[%c208, %c0_33], %56 {strides = array<i32>} : memref<392x384xf32, #tpu.memory_space<vmem>>, vector<8x384xf32>,
    %58 = vector.extract_strided_slice %3 {offsets = [0, 78], sizes = [8, 384], strides = [1, 1]} : vector<8x552xf32> to vector<8x384xf32>
    %c216 = arith.constant 216 : index
    %c0_34 = arith.constant 0 : index
    %59 = vector.load %arg5[%c216, %c0_34] : memref<392x384xf32, #tpu.memory_space<vmem>>, vector<8x384xf32>
    tpu.vector_store %arg5[%c216, %c0_34], %58 {strides = array<i32>} : memref<392x384xf32, #tpu.memory_space<vmem>>, vector<8x384xf32>,
    %60 = vector.extract_strided_slice %3 {offsets = [0, 96], sizes = [8, 384], strides = [1, 1]} : vector<8x552xf32> to vector<8x384xf32>
    %c224 = arith.constant 224 : index
    %c0_35 = arith.constant 0 : index
    %61 = vector.load %arg5[%c224, %c0_35] : memref<392x384xf32, #tpu.memory_space<vmem>>, vector<8x384xf32>
    tpu.vector_store %arg5[%c224, %c0_35], %60 {strides = array<i32>} : memref<392x384xf32, #tpu.memory_space<vmem>>, vector<8x384xf32>,
    %62 = vector.extract_strided_slice %3 {offsets = [0, 97], sizes = [8, 384], strides = [1, 1]} : vector<8x552xf32> to vector<8x384xf32>
    %c232 = arith.constant 232 : index
    %c0_36 = arith.constant 0 : index
    %63 = vector.load %arg5[%c232, %c0_36] : memref<392x384xf32, #tpu.memory_space<vmem>>, vector<8x384xf32>
    tpu.vector_store %arg5[%c232, %c0_36], %62 {strides = array<i32>} : memref<392x384xf32, #tpu.memory_space<vmem>>, vector<8x384xf32>,
    %64 = vector.extract_strided_slice %3 {offsets = [0, 98], sizes = [8, 384], strides = [1, 1]} : vector<8x552xf32> to vector<8x384xf32>
    %c240 = arith.constant 240 : index
    %c0_37 = arith.constant 0 : index
    %65 = vector.load %arg5[%c240, %c0_37] : memref<392x384xf32, #tpu.memory_space<vmem>>, vector<8x384xf32>
    tpu.vector_store %arg5[%c240, %c0_37], %64 {strides = array<i32>} : memref<392x384xf32, #tpu.memory_space<vmem>>, vector<8x384xf32>,
    %66 = vector.extract_strided_slice %3 {offsets = [0, 99], sizes = [8, 384], strides = [1, 1]} : vector<8x552xf32> to vector<8x384xf32>
    %c248 = arith.constant 248 : index
    %c0_38 = arith.constant 0 : index
    %67 = vector.load %arg5[%c248, %c0_38] : memref<392x384xf32, #tpu.memory_space<vmem>>, vector<8x384xf32>
    tpu.vector_store %arg5[%c248, %c0_38], %66 {strides = array<i32>} : memref<392x384xf32, #tpu.memory_space<vmem>>, vector<8x384xf32>,
    %68 = vector.extract_strided_slice %3 {offsets = [0, 100], sizes = [8, 384], strides = [1, 1]} : vector<8x552xf32> to vector<8x384xf32>
    %c256 = arith.constant 256 : index
    %c0_39 = arith.constant 0 : index
    %69 = vector.load %arg5[%c256, %c0_39] : memref<392x384xf32, #tpu.memory_space<vmem>>, vector<8x384xf32>
    tpu.vector_store %arg5[%c256, %c0_39], %68 {strides = array<i32>} : memref<392x384xf32, #tpu.memory_space<vmem>>, vector<8x384xf32>,
    %70 = vector.extract_strided_slice %3 {offsets = [0, 101], sizes = [8, 384], strides = [1, 1]} : vector<8x552xf32> to vector<8x384xf32>
    %c264 = arith.constant 264 : index
    %c0_40 = arith.constant 0 : index
    %71 = vector.load %arg5[%c264, %c0_40] : memref<392x384xf32, #tpu.memory_space<vmem>>, vector<8x384xf32>
    tpu.vector_store %arg5[%c264, %c0_40], %70 {strides = array<i32>} : memref<392x384xf32, #tpu.memory_space<vmem>>, vector<8x384xf32>,
    %72 = vector.extract_strided_slice %3 {offsets = [0, 102], sizes = [8, 384], strides = [1, 1]} : vector<8x552xf32> to vector<8x384xf32>
    %c272 = arith.constant 272 : index
    %c0_41 = arith.constant 0 : index
    %73 = vector.load %arg5[%c272, %c0_41] : memref<392x384xf32, #tpu.memory_space<vmem>>, vector<8x384xf32>
    tpu.vector_store %arg5[%c272, %c0_41], %72 {strides = array<i32>} : memref<392x384xf32, #tpu.memory_space<vmem>>, vector<8x384xf32>,
    %74 = vector.extract_strided_slice %3 {offsets = [0, 120], sizes = [8, 384], strides = [1, 1]} : vector<8x552xf32> to vector<8x384xf32>
    %c280 = arith.constant 280 : index
    %c0_42 = arith.constant 0 : index
    %75 = vector.load %arg5[%c280, %c0_42] : memref<392x384xf32, #tpu.memory_space<vmem>>, vector<8x384xf32>
    tpu.vector_store %arg5[%c280, %c0_42], %74 {strides = array<i32>} : memref<392x384xf32, #tpu.memory_space<vmem>>, vector<8x384xf32>,
    %76 = vector.extract_strided_slice %3 {offsets = [0, 121], sizes = [8, 384], strides = [1, 1]} : vector<8x552xf32> to vector<8x384xf32>
    %c288 = arith.constant 288 : index
    %c0_43 = arith.constant 0 : index
    %77 = vector.load %arg5[%c288, %c0_43] : memref<392x384xf32, #tpu.memory_space<vmem>>, vector<8x384xf32>
    tpu.vector_store %arg5[%c288, %c0_43], %76 {strides = array<i32>} : memref<392x384xf32, #tpu.memory_space<vmem>>, vector<8x384xf32>,
    %78 = vector.extract_strided_slice %3 {offsets = [0, 122], sizes = [8, 384], strides = [1, 1]} : vector<8x552xf32> to vector<8x384xf32>
    %c296 = arith.constant 296 : index
    %c0_44 = arith.constant 0 : index
    %79 = vector.load %arg5[%c296, %c0_44] : memref<392x384xf32, #tpu.memory_space<vmem>>, vector<8x384xf32>
    tpu.vector_store %arg5[%c296, %c0_44], %78 {strides = array<i32>} : memref<392x384xf32, #tpu.memory_space<vmem>>, vector<8x384xf32>,
    %80 = vector.extract_strided_slice %3 {offsets = [0, 123], sizes = [8, 384], strides = [1, 1]} : vector<8x552xf32> to vector<8x384xf32>
    %c304 = arith.constant 304 : index
    %c0_45 = arith.constant 0 : index
    %81 = vector.load %arg5[%c304, %c0_45] : memref<392x384xf32, #tpu.memory_space<vmem>>, vector<8x384xf32>
    tpu.vector_store %arg5[%c304, %c0_45], %80 {strides = array<i32>} : memref<392x384xf32, #tpu.memory_space<vmem>>, vector<8x384xf32>,
    %82 = vector.extract_strided_slice %3 {offsets = [0, 124], sizes = [8, 384], strides = [1, 1]} : vector<8x552xf32> to vector<8x384xf32>
    %c312 = arith.constant 312 : index
    %c0_46 = arith.constant 0 : index
    %83 = vector.load %arg5[%c312, %c0_46] : memref<392x384xf32, #tpu.memory_space<vmem>>, vector<8x384xf32>
    tpu.vector_store %arg5[%c312, %c0_46], %82 {strides = array<i32>} : memref<392x384xf32, #tpu.memory_space<vmem>>, vector<8x384xf32>,
    %84 = vector.extract_strided_slice %3 {offsets = [0, 125], sizes = [8, 384], strides = [1, 1]} : vector<8x552xf32> to vector<8x384xf32>
    %c320 = arith.constant 320 : index
    %c0_47 = arith.constant 0 : index
    %85 = vector.load %arg5[%c320, %c0_47] : memref<392x384xf32, #tpu.memory_space<vmem>>, vector<8x384xf32>
    tpu.vector_store %arg5[%c320, %c0_47], %84 {strides = array<i32>} : memref<392x384xf32, #tpu.memory_space<vmem>>, vector<8x384xf32>,
    %86 = vector.extract_strided_slice %3 {offsets = [0, 126], sizes = [8, 384], strides = [1, 1]} : vector<8x552xf32> to vector<8x384xf32>
    %c328 = arith.constant 328 : index
    %c0_48 = arith.constant 0 : index
    %87 = vector.load %arg5[%c328, %c0_48] : memref<392x384xf32, #tpu.memory_space<vmem>>, vector<8x384xf32>
    tpu.vector_store %arg5[%c328, %c0_48], %86 {strides = array<i32>} : memref<392x384xf32, #tpu.memory_space<vmem>>, vector<8x384xf32>,
    %88 = vector.extract_strided_slice %3 {offsets = [0, 144], sizes = [8, 384], strides = [1, 1]} : vector<8x552xf32> to vector<8x384xf32>
    %c336 = arith.constant 336 : index
    %c0_49 = arith.constant 0 : index
    %89 = vector.load %arg5[%c336, %c0_49] : memref<392x384xf32, #tpu.memory_space<vmem>>, vector<8x384xf32>
    tpu.vector_store %arg5[%c336, %c0_49], %88 {strides = array<i32>} : memref<392x384xf32, #tpu.memory_space<vmem>>, vector<8x384xf32>,
    %90 = vector.extract_strided_slice %3 {offsets = [0, 145], sizes = [8, 384], strides = [1, 1]} : vector<8x552xf32> to vector<8x384xf32>
    %c344 = arith.constant 344 : index
    %c0_50 = arith.constant 0 : index
    %91 = vector.load %arg5[%c344, %c0_50] : memref<392x384xf32, #tpu.memory_space<vmem>>, vector<8x384xf32>
    tpu.vector_store %arg5[%c344, %c0_50], %90 {strides = array<i32>} : memref<392x384xf32, #tpu.memory_space<vmem>>, vector<8x384xf32>,
    %92 = vector.extract_strided_slice %3 {offsets = [0, 146], sizes = [8, 384], strides = [1, 1]} : vector<8x552xf32> to vector<8x384xf32>
    %c352 = arith.constant 352 : index
    %c0_51 = arith.constant 0 : index
    %93 = vector.load %arg5[%c352, %c0_51] : memref<392x384xf32, #tpu.memory_space<vmem>>, vector<8x384xf32>
    tpu.vector_store %arg5[%c352, %c0_51], %92 {strides = array<i32>} : memref<392x384xf32, #tpu.memory_space<vmem>>, vector<8x384xf32>,
    %94 = vector.extract_strided_slice %3 {offsets = [0, 147], sizes = [8, 384], strides = [1, 1]} : vector<8x552xf32> to vector<8x384xf32>
    %c360 = arith.constant 360 : index
    %c0_52 = arith.constant 0 : index
    %95 = vector.load %arg5[%c360, %c0_52] : memref<392x384xf32, #tpu.memory_space<vmem>>, vector<8x384xf32>
    tpu.vector_store %arg5[%c360, %c0_52], %94 {strides = array<i32>} : memref<392x384xf32, #tpu.memory_space<vmem>>, vector<8x384xf32>,
    %96 = vector.extract_strided_slice %3 {offsets = [0, 148], sizes = [8, 384], strides = [1, 1]} : vector<8x552xf32> to vector<8x384xf32>
    %c368 = arith.constant 368 : index
    %c0_53 = arith.constant 0 : index
    %97 = vector.load %arg5[%c368, %c0_53] : memref<392x384xf32, #tpu.memory_space<vmem>>, vector<8x384xf32>
    tpu.vector_store %arg5[%c368, %c0_53], %96 {strides = array<i32>} : memref<392x384xf32, #tpu.memory_space<vmem>>, vector<8x384xf32>,
    %98 = vector.extract_strided_slice %3 {offsets = [0, 149], sizes = [8, 384], strides = [1, 1]} : vector<8x552xf32> to vector<8x384xf32>
    %c376 = arith.constant 376 : index
    %c0_54 = arith.constant 0 : index
    %99 = vector.load %arg5[%c376, %c0_54] : memref<392x384xf32, #tpu.memory_space<vmem>>, vector<8x384xf32>
    tpu.vector_store %arg5[%c376, %c0_54], %98 {strides = array<i32>} : memref<392x384xf32, #tpu.memory_space<vmem>>, vector<8x384xf32>,
    %100 = vector.extract_strided_slice %3 {offsets = [0, 150], sizes = [8, 384], strides = [1, 1]} : vector<8x552xf32> to vector<8x384xf32>
    %c384 = arith.constant 384 : index
    %c0_55 = arith.constant 0 : index
    %101 = vector.load %arg5[%c384, %c0_55] : memref<392x384xf32, #tpu.memory_space<vmem>>, vector<8x384xf32>
    tpu.vector_store %arg5[%c384, %c0_55], %100 {strides = array<i32>} : memref<392x384xf32, #tpu.memory_space<vmem>>, vector<8x384xf32>,
    %c0_56 = arith.constant 0 : index
    %c0_57 = arith.constant 0 : index
    %102 = vector.load %arg5[%c0_56, %c0_57] : memref<392x384xf32, #tpu.memory_space<vmem>>, vector<392x384xf32>
    %cst = arith.constant dense<0.000000e+00> : vector<24x384xf32>
    %103 = tpu.matmul %0, %102, %cst {dimension_numbers = #tpu.dot_dimension_numbers<[1], [0], [0], [1], [0, 0, 1, 1], [], []>} : vector<24x392xf32>, vector<392x384xf32>, vector<24x384xf32> -> vector<24x384xf32>
    %104 = vector.broadcast %1 : vector<24x1xf32> to vector<24x384xf32>
    %105 = arith.addf %103, %104 : vector<24x384xf32>
    %106 = vector.extract_strided_slice %105 {offsets = [0, 0], sizes = [8, 384], strides = [1, 1]} : vector<24x384xf32> to vector<8x384xf32>
    %cst_58 = arith.constant 0.000000e+00 : f32
    %107 = vector.broadcast %cst_58 : f32 to vector<8x384xf32>
    %108 = arith.maximumf %106, %107 : vector<8x384xf32>
    %109 = vector.extract_strided_slice %105 {offsets = [8, 0], sizes = [8, 384], strides = [1, 1]} : vector<24x384xf32> to vector<8x384xf32>
    %cst_59 = arith.constant 0.000000e+00 : f32
    %110 = vector.broadcast %cst_59 : f32 to vector<8x384xf32>
    %111 = arith.maximumf %109, %110 : vector<8x384xf32>
    %112 = arith.addf %108, %111 : vector<8x384xf32>
    %113 = vector.extract_strided_slice %105 {offsets = [16, 0], sizes = [8, 384], strides = [1, 1]} : vector<24x384xf32> to vector<8x384xf32>
    %cst_60 = arith.constant 0.000000e+00 : f32
    %114 = vector.broadcast %cst_60 : f32 to vector<8x384xf32>
    %115 = arith.maximumf %113, %114 : vector<8x384xf32>
    %116 = arith.addf %112, %115 : vector<8x384xf32>
    %c0_61 = arith.constant 0 : index
    %c0_62 = arith.constant 0 : index
    %c0_63 = arith.constant 0 : index
    %117 = vector.load %arg4[%c0_61, %c0_62, %c0_63] : memref<1x8x384xf32, #tpu.memory_space<vmem>>, vector<1x8x384xf32>
    %118 = vector.shape_cast %117 : vector<1x8x384xf32> to vector<8x384xf32>
    %119 = vector.shape_cast %116 : vector<8x384xf32> to vector<1x8x384xf32>
    tpu.vector_store %arg4[%c0_61, %c0_62, %c0_63], %119 {strides = array<i32>} : memref<1x8x384xf32, #tpu.memory_space<vmem>>, vector<1x8x384xf32>,
    return
  }
  func.func @transform_0(%arg0: i32) -> (i32, i32, i32) {
    %c0_i32 = arith.constant 0 : i32
    %c0_i32_0 = arith.constant 0 : i32
    %c0_i32_1 = arith.constant 0 : i32
    return %arg0, %c0_i32, %c0_i32_0 : i32, i32, i32
  }
  func.func @transform_1(%arg0: i32) -> (i32, i32) {
    %c0_i32 = arith.constant 0 : i32
    %c0_i32_0 = arith.constant 0 : i32
    %c0_i32_1 = arith.constant 0 : i32
    return %c0_i32, %c0_i32_0 : i32, i32
  }
  func.func @transform_2(%arg0: i32) -> (i32, i32) {
    %c0_i32 = arith.constant 0 : i32
    %c0_i32_0 = arith.constant 0 : i32
    %c0_i32_1 = arith.constant 0 : i32
    return %c0_i32, %c0_i32_0 : i32, i32
  }
  func.func @transform_3(%arg0: i32) -> (i32, i32, i32) {
    %c0_i32 = arith.constant 0 : i32
    %c0_i32_0 = arith.constant 0 : i32
    %c0_i32_1 = arith.constant 0 : i32
    return %arg0, %c0_i32, %c0_i32_0 : i32, i32, i32
  }
}

</mosaic_0001>

<llo_original>
// kernel: multi_scale_feature_extractor.1
$region0: #{multi_scale_feature_extractor.1}
  #allocation0 [shape = 'u32[]', space=smem, size = 0x4, offset = 0x4, fixed_abs, tag = 'smem constant byte address 0x4 - core index']
  #allocation1 [shape = 'u32[144,128]{1,0:T(1,128)}', space=vmem, size = 0x12000, scoped, tag = 'internal scratch']
  #allocation2 [shape = 'f32[392,384]{1,0:T(8,128)}', space=vmem, size = 0x93000, scoped, tag = 'scratch operand']
  %s0 = inlined_call_operand.vmem [shape: f32[2,8,552], index: 0, kind: input, shape index: {}]
  %s1 = inlined_call_operand.vmem [shape: f32[24,392], index: 1, kind: input, shape index: {}]
  %s2 = inlined_call_operand.vmem [shape: f32[24,1], index: 2, kind: input, shape index: {}]
  %s3 = inlined_call_operand.vmem [shape: f32[2,8,384], index: 3, kind: output, shape index: {}]
  %s4 = sld [smem:[#allocation0]]
  $region45: #{multi_scale_feature_extractor.1} parent=0
    _
  %s6 = ssub.s32 1, %s4
  %s7 = scalar_select 0, %s6, %s4
  loop: start=0, step=1, limit=4
  $region2: #{multi_scale_feature_extractor.1} parent=0 // loop_pre_header
    _
  $region3: #{multi_scale_feature_extractor.1} parent=0 // loop_header
    %s9 = sphi 0, %s13
    %p10 = scmp.ge.s32.totalorder %s9, 4
    %s19 = sphi 0, %s21
    %s22 = sphi 0, %s19
    %s23 = sphi 0, %s22
    %s39 = sphi 0, %s23
    %s43 = sphi 0, %s43
    %s45 = sphi 0, %s43
    %s46 = sphi 0, %s45
    %s60 = sphi 0, %s46
    %s64 = sphi 0, %s64
    %s66 = sphi 0, %s64
    %s67 = sphi 0, %s66
    %s81 = sphi 0, %s67
    %s87 = sphi 0, %s89
    %s90 = sphi 0, %s87
    %s91 = sphi 0, %s90
    %s107 = sphi 0, %s91
  $region4: #{multi_scale_feature_extractor.1} parent=0 // loop_header_branch
    %12 = sbr.rel (%p10) target = $region8
  $region5: #{multi_scale_feature_extractor.1} parent=0 // loop_body
    %s14 = ssub.s32 %s9, 1
    %s15 = ssub.s32 %s9, 2
    %s16 = sadd.s32 %s9, 1
    %s17 = ssub.s32 %s9, %s16
    %p18 = scmp.eq.s32.totalorder %s17, 0
    %s20 = sadd.s32 %s19, 1
    %s21 = scalar_select %p18, %s19, %s20
    %p24 = pneg %p18
    %p25 = scmp.eq.s32.totalorder %s9, 1
    %p26 = por %p24, %p25
    %p27 = scmp.ne.s32.totalorder %s19, %s22
    %p28 = scmp.eq.s32.totalorder %s9, 0
    %p29 = por %p27, %p28
    %p30 = scmp.ne.s32.totalorder %s19, %s22
    %p31 = scmp.eq.s32.totalorder %s14, 1
    %p32 = por %p30, %p31
    %p33 = scmp.ne.s32.totalorder %s22, %s23
    %p34 = scmp.eq.s32.totalorder %s14, 0
    %p35 = por %p33, %p34
    %p36 = scmp.ne.s32.totalorder %s22, %s23
    %p37 = scmp.eq.s32.totalorder %s15, 1
    %p38 = por %p36, %p37
    %p40 = scmp.ne.s32.totalorder %s23, %s39
    %p41 = scmp.eq.s32.totalorder %s15, 0
    %p42 = por %p40, %p41
    %s44 = sadd.s32 %s43, 1
    %p47 = scmp.eq.s32.totalorder %s9, 1
    %p48 = scmp.ne.s32.totalorder %s43, %s45
    %p49 = scmp.eq.s32.totalorder %s9, 0
    %p50 = por %p48, %p49
    %p51 = scmp.ne.s32.totalorder %s43, %s45
    %p52 = scmp.eq.s32.totalorder %s14, 1
    %p53 = por %p51, %p52
    %p54 = scmp.ne.s32.totalorder %s45, %s46
    %p55 = scmp.eq.s32.totalorder %s14, 0
    %p56 = por %p54, %p55
    %p57 = scmp.ne.s32.totalorder %s45, %s46
    %p58 = scmp.eq.s32.totalorder %s15, 1
    %p59 = por %p57, %p58
    %p61 = scmp.ne.s32.totalorder %s46, %s60
    %p62 = scmp.eq.s32.totalorder %s15, 0
    %p63 = por %p61, %p62
    %s65 = sadd.s32 %s64, 1
    %p68 = scmp.eq.s32.totalorder %s9, 1
    %p69 = scmp.ne.s32.totalorder %s64, %s66
    %p70 = scmp.eq.s32.totalorder %s9, 0
    %p71 = por %p69, %p70
    %p72 = scmp.ne.s32.totalorder %s64, %s66
    %p73 = scmp.eq.s32.totalorder %s14, 1
    %p74 = por %p72, %p73
    %p75 = scmp.ne.s32.totalorder %s66, %s67
    %p76 = scmp.eq.s32.totalorder %s14, 0
    %p77 = por %p75, %p76
    %p78 = scmp.ne.s32.totalorder %s66, %s67
    %p79 = scmp.eq.s32.totalorder %s15, 1
    %p80 = por %p78, %p79
    %p82 = scmp.ne.s32.totalorder %s67, %s81
    %p83 = scmp.eq.s32.totalorder %s15, 0
    %p84 = por %p82, %p83
    %s85 = ssub.s32 %s9, %s16
    %p86 = scmp.eq.s32.totalorder %s85, 0
    %s88 = sadd.s32 %s87, 1
    %s89 = scalar_select %p86, %s87, %s88
    %p92 = pneg %p86
    %p93 = scmp.eq.s32.totalorder %s9, 1
    %p94 = por %p92, %p93
    %p95 = scmp.ne.s32.totalorder %s87, %s90
    %p96 = scmp.eq.s32.totalorder %s9, 0
    %p97 = por %p95, %p96
    %p98 = scmp.ne.s32.totalorder %s87, %s90
    %p99 = scmp.eq.s32.totalorder %s14, 1
    %p100 = por %p98, %p99
    %p101 = scmp.ne.s32.totalorder %s90, %s91
    %p102 = scmp.eq.s32.totalorder %s14, 0
    %p103 = por %p101, %p102
    %p104 = scmp.ne.s32.totalorder %s90, %s91
    %p105 = scmp.eq.s32.totalorder %s15, 1
    %p106 = por %p104, %p105
    %p108 = scmp.ne.s32.totalorder %s91, %s107
    %p109 = scmp.eq.s32.totalorder %s15, 0
    %p110 = por %p108, %p109
    %p111 = scmp.le.s32.totalorder 1, %s9
    %p112 = scmp.lt.s32.totalorder %s9, 3
    %p113 = pnand %p111, %p112
    %p114 = pneg %p113
    // Predicated region
    $region9: #{multi_scale_feature_extractor.1} parent=5 // pred_check
      _
    $region10: #{multi_scale_feature_extractor.1} parent=5 // pred_check_branch
      %116 = sbr.rel (%p113) target = $region12
    $region11: #{multi_scale_feature_extractor.1} parent=5 // pred_region
      %s117 = ssub.s32 %s9, 1
      // Predicated region
      $region13: #{multi_scale_feature_extractor.1} parent=11 // pred_check
        %p118 = pneg %p56
      $region14: #{multi_scale_feature_extractor.1} parent=11 // pred_check_branch
        %120 = sbr.rel (%p118) target = $region16
      $region15: #{multi_scale_feature_extractor.1} parent=11 // pred_region
        _
      $region16: #{multi_scale_feature_extractor.1} parent=11 // pred_fallthru
        _
      // Predicated region
      $region17: #{multi_scale_feature_extractor.1} parent=11 // pred_check
        %p121 = pneg %p77
      $region18: #{multi_scale_feature_extractor.1} parent=11 // pred_check_branch
        %123 = sbr.rel (%p121) target = $region20
      $region19: #{multi_scale_feature_extractor.1} parent=11 // pred_region
        _
      $region20: #{multi_scale_feature_extractor.1} parent=11 // pred_fallthru
        _
    $region12: #{multi_scale_feature_extractor.1} parent=5 // pred_fallthru
      _
    %p124 = scmp.lt.s32.totalorder %s9, 2
    // Predicated region
    $region21: #{multi_scale_feature_extractor.1} parent=5 // pred_check
      %p125 = pneg %p124
    $region22: #{multi_scale_feature_extractor.1} parent=5 // pred_check_branch
      %127 = sbr.rel (%p125) target = $region24
    $region23: #{multi_scale_feature_extractor.1} parent=5 // pred_region
      // Predicated region
      $region25: #{multi_scale_feature_extractor.1} parent=23 // pred_check
        %p128 = pneg %p29
      $region26: #{multi_scale_feature_extractor.1} parent=23 // pred_check_branch
        %130 = sbr.rel (%p128) target = $region28
      $region27: #{multi_scale_feature_extractor.1} parent=23 // pred_region
        %p131 = scmp.lt.s32.totalorder %s9, 1
        %s132 = scalar_select %p131, %s9, 1
        %s133 = smul.addr %s132, 5
        %s134 = smul.addr %s133, 8
        %s135 = scalar_lea.vmem %s0, %s134
      $region28: #{multi_scale_feature_extractor.1} parent=23 // pred_fallthru
        _
    $region24: #{multi_scale_feature_extractor.1} parent=5 // pred_fallthru
      _
    %p136 = scmp.le.s32.totalorder 1, %s9
    %p137 = scmp.lt.s32.totalorder %s9, 3
    %p138 = pnand %p136, %p137
    %p139 = pneg %p138
    // Predicated region
    $region29: #{multi_scale_feature_extractor.1} parent=5 // pred_check
      _
    $region30: #{multi_scale_feature_extractor.1} parent=5 // pred_check_branch
      %141 = sbr.rel (%p138) target = $region32
    $region31: #{multi_scale_feature_extractor.1} parent=5 // pred_region
      %s142 = ssub.s32 %s9, 1
      %p143 = scmp.lt.s32.totalorder %s14, 1
      %s144 = scalar_select %p143, %s14, 1
      %s145 = smul.addr %s144, 5
      %s146 = smul.addr %s145, 8
      %s147 = scalar_lea.vmem %s0, %s146
      %p148 = pneg %p35
      %p149 = pneg %p32
      %p150 = pneg %p56
      %p151 = pneg %p53
      %p152 = pneg %p77
      %p153 = pneg %p74
      %p154 = pneg %p103
      %p155 = pneg %p100
      %p156 = scmp.lt.s32.totalorder %s14, 1
      %s157 = scalar_select %p156, %s14, 1
      %s158 = smul.addr %s157, 3
      %s159 = smul.addr %s158, 8
      %s160 = scalar_lea.vmem %s3, %s159
      %p161 = scmp.lt.s32.totalorder %s14, 1
      %s162 = scalar_select %p161, %s14, 1
      %s163 = smul.addr %s162, 5
      %s164 = smul.addr %s163, 8
      %s165 = scalar_lea.vmem %s0, %s164
      %p166 = scmp.lt.s32.totalorder %s14, 1
      %s167 = scalar_select %p166, %s14, 1
      %s168 = smul.addr %s167, 3
      %s169 = smul.addr %s168, 8
      %s170 = scalar_lea.vmem %s3, %s169
      %v171 = vld [vmem:[%s1] sm:$0xff]
      %v172 = vld [vmem:[%s1 + $0x8] sm:$0xff]
      %v173 = vld [vmem:[%s1 + $0x10] sm:$0xff]
      %v174 = vld [vmem:[%s1 + $0x18] sm:$0xff]
      %v175 = vld [vmem:[%s1 + $0x20] sm:$0xff]
      %v176 = vld [vmem:[%s1 + $0x28] sm:$0xff]
      %v177 = vld [vmem:[%s1 + $0x30] sm:$0xff]
      %v178 = vld [vmem:[%s1 + $0x38] sm:$0xff]
      %v179 = vld [vmem:[%s1 + $0x40] sm:$0xff]
      %v180 = vld [vmem:[%s1 + $0x48] sm:$0xff]
      %v181 = vld [vmem:[%s1 + $0x50] sm:$0xff]
      %v182 = vld [vmem:[%s1 + $0x58] sm:$0xff]
      %v183 = vld [vmem:[%s2] sm:$0xff]
      %v184 = vld [vmem:[%s2 + $0x8] sm:$0xff]
      %v185 = vld [vmem:[%s2 + $0x10] sm:$0xff]
      %v186 = vld [vmem:[%s165] sm:$0xff]
      %v187 = vld [vmem:[%s165 + $0x8] sm:$0xff]
      %v188 = vld [vmem:[%s165 + $0x10] sm:$0xff]
      %v189 = vld [vmem:[%s165 + $0x18] sm:$0xff]
      %v190 = vld [vmem:[%s165 + $0x20] sm:$0xff]
      %191 = vst [vmem:[#allocation2] sm:$0xff] %v186
      %192 = vst [vmem:[#allocation2 + $0x8] sm:$0xff] %v187
      %193 = vst [vmem:[#allocation2 + $0x10] sm:$0xff] %v188
      %198 = vrot.lane.b32.xlu0 %v186, 127
      %v199 = vpop.permute.xlu0 %198
      %200 = vrot.lane.b32.xlu0 %v187, 127
      %v201 = vpop.permute.xlu0 %200
      %202 = vrot.lane.b32.xlu0 %v188, 127
      %v203 = vpop.permute.xlu0 %202
      %204 = vrot.lane.b32.xlu0 %v189, 127
      %v205 = vpop.permute.xlu0 %204
      %vm206 = vcmask 1039360
      %v207 = vsel %vm206, %v199, %v201
      %v208 = vsel %vm206, %v201, %v203
      %v209 = vsel %vm206, %v203, %v205
      %213 = vst [vmem:[#allocation2 + $0x18] sm:$0xff] %v207
      %214 = vst [vmem:[#allocation2 + $0x20] sm:$0xff] %v208
      %215 = vst [vmem:[#allocation2 + $0x28] sm:$0xff] %v209
      %216 = vrot.lane.b32.xlu0 %v186, 126
      %v217 = vpop.permute.xlu0 %216
      %218 = vrot.lane.b32.xlu0 %v187, 126
      %v219 = vpop.permute.xlu0 %218
      %220 = vrot.lane.b32.xlu0 %v188, 126
      %v221 = vpop.permute.xlu0 %220
      %222 = vrot.lane.b32.xlu0 %v189, 126
      %v223 = vpop.permute.xlu0 %222
      %vm224 = vcmask 1031168
      %v225 = vsel %vm224, %v217, %v219
      %v226 = vsel %vm224, %v219, %v221
      %v227 = vsel %vm224, %v221, %v223
      %231 = vst [vmem:[#allocation2 + $0x30] sm:$0xff] %v225
      %232 = vst [vmem:[#allocation2 + $0x38] sm:$0xff] %v226
      %233 = vst [vmem:[#allocation2 + $0x40] sm:$0xff] %v227
      %234 = vrot.lane.b32.xlu0 %v186, 125
      %v235 = vpop.permute.xlu0 %234
      %236 = vrot.lane.b32.xlu0 %v187, 125
      %v237 = vpop.permute.xlu0 %236
      %238 = vrot.lane.b32.xlu0 %v188, 125
      %v239 = vpop.permute.xlu0 %238
      %240 = vrot.lane.b32.xlu0 %v189, 125
      %v241 = vpop.permute.xlu0 %240
      %vm242 = vcmask 1022976
      %v243 = vsel %vm242, %v235, %v237
      %v244 = vsel %vm242, %v237, %v239
      %v245 = vsel %vm242, %v239, %v241
      %249 = vst [vmem:[#allocation2 + $0x48] sm:$0xff] %v243
      %250 = vst [vmem:[#allocation2 + $0x50] sm:$0xff] %v244
      %251 = vst [vmem:[#allocation2 + $0x58] sm:$0xff] %v245
      %252 = vrot.lane.b32.xlu0 %v186, 124
      %v253 = vpop.permute.xlu0 %252
      %254 = vrot.lane.b32.xlu0 %v187, 124
      %v255 = vpop.permute.xlu0 %254
      %256 = vrot.lane.b32.xlu0 %v188, 124
      %v257 = vpop.permute.xlu0 %256
      %258 = vrot.lane.b32.xlu0 %v189, 124
      %v259 = vpop.permute.xlu0 %258
      %vm260 = vcmask 1014784
      %v261 = vsel %vm260, %v253, %v255
      %v262 = vsel %vm260, %v255, %v257
      %v263 = vsel %vm260, %v257, %v259
      %267 = vst [vmem:[#allocation2 + $0x60] sm:$0xff] %v261
      %268 = vst [vmem:[#allocation2 + $0x68] sm:$0xff] %v262
      %269 = vst [vmem:[#allocation2 + $0x70] sm:$0xff] %v263
      %270 = vrot.lane.b32.xlu0 %v186, 123
      %v271 = vpop.permute.xlu0 %270
      %272 = vrot.lane.b32.xlu0 %v187, 123
      %v273 = vpop.permute.xlu0 %272
      %274 = vrot.lane.b32.xlu0 %v188, 123
      %v275 = vpop.permute.xlu0 %274
      %276 = vrot.lane.b32.xlu0 %v189, 123
      %v277 = vpop.permute.xlu0 %276
      %vm278 = vcmask 1006592
      %v279 = vsel %vm278, %v271, %v273
      %v280 = vsel %vm278, %v273, %v275
      %v281 = vsel %vm278, %v275, %v277
      %285 = vst [vmem:[#allocation2 + $0x78] sm:$0xff] %v279
      %286 = vst [vmem:[#allocation2 + $0x80] sm:$0xff] %v280
      %287 = vst [vmem:[#allocation2 + $0x88] sm:$0xff] %v281
      %288 = vrot.lane.b32.xlu0 %v186, 122
      %v289 = vpop.permute.xlu0 %288
      %290 = vrot.lane.b32.xlu0 %v187, 122
      %v291 = vpop.permute.xlu0 %290
      %292 = vrot.lane.b32.xlu0 %v188, 122
      %v293 = vpop.permute.xlu0 %292
      %294 = vrot.lane.b32.xlu0 %v189, 122
      %v295 = vpop.permute.xlu0 %294
      %vm296 = vcmask 998400
      %v297 = vsel %vm296, %v289, %v291
      %v298 = vsel %vm296, %v291, %v293
      %v299 = vsel %vm296, %v293, %v295
      %303 = vst [vmem:[#allocation2 + $0x90] sm:$0xff] %v297
      %304 = vst [vmem:[#allocation2 + $0x98] sm:$0xff] %v298
      %305 = vst [vmem:[#allocation2 + $0xa0] sm:$0xff] %v299
      %306 = vrot.lane.b32.xlu0 %v186, 104
      %v307 = vpop.permute.xlu0 %306
      %308 = vrot.lane.b32.xlu0 %v187, 104
      %v309 = vpop.permute.xlu0 %308
      %310 = vrot.lane.b32.xlu0 %v188, 104
      %v311 = vpop.permute.xlu0 %310
      %312 = vrot.lane.b32.xlu0 %v189, 104
      %v313 = vpop.permute.xlu0 %312
      %vm314 = vcmask 850944
      %v315 = vsel %vm314, %v307, %v309
      %v316 = vsel %vm314, %v309, %v311
      %v317 = vsel %vm314, %v311, %v313
      %321 = vst [vmem:[#allocation2 + $0xa8] sm:$0xff] %v315
      %322 = vst [vmem:[#allocation2 + $0xb0] sm:$0xff] %v316
      %323 = vst [vmem:[#allocation2 + $0xb8] sm:$0xff] %v317
      %324 = vrot.lane.b32.xlu0 %v186, 103
      %v325 = vpop.permute.xlu0 %324
      %326 = vrot.lane.b32.xlu0 %v187, 103
      %v327 = vpop.permute.xlu0 %326
      %328 = vrot.lane.b32.xlu0 %v188, 103
      %v329 = vpop.permute.xlu0 %328
      %330 = vrot.lane.b32.xlu0 %v189, 103
      %v331 = vpop.permute.xlu0 %330
      %vm332 = vcmask 842752
      %v333 = vsel %vm332, %v325, %v327
      %v334 = vsel %vm332, %v327, %v329
      %v335 = vsel %vm332, %v329, %v331
      %339 = vst [vmem:[#allocation2 + $0xc0] sm:$0xff] %v333
      %340 = vst [vmem:[#allocation2 + $0xc8] sm:$0xff] %v334
      %341 = vst [vmem:[#allocation2 + $0xd0] sm:$0xff] %v335
      %342 = vrot.lane.b32.xlu0 %v186, 102
      %v343 = vpop.permute.xlu0 %342
      %344 = vrot.lane.b32.xlu0 %v187, 102
      %v345 = vpop.permute.xlu0 %344
      %346 = vrot.lane.b32.xlu0 %v188, 102
      %v347 = vpop.permute.xlu0 %346
      %348 = vrot.lane.b32.xlu0 %v189, 102
      %v349 = vpop.permute.xlu0 %348
      %vm350 = vcmask 834560
      %v351 = vsel %vm350, %v343, %v345
      %v352 = vsel %vm350, %v345, %v347
      %v353 = vsel %vm350, %v347, %v349
      %357 = vst [vmem:[#allocation2 + $0xd8] sm:$0xff] %v351
      %358 = vst [vmem:[#allocation2 + $0xe0] sm:$0xff] %v352
      %359 = vst [vmem:[#allocation2 + $0xe8] sm:$0xff] %v353
      %360 = vrot.lane.b32.xlu0 %v186, 101
      %v361 = vpop.permute.xlu0 %360
      %362 = vrot.lane.b32.xlu0 %v187, 101
      %v363 = vpop.permute.xlu0 %362
      %364 = vrot.lane.b32.xlu0 %v188, 101
      %v365 = vpop.permute.xlu0 %364
      %366 = vrot.lane.b32.xlu0 %v189, 101
      %v367 = vpop.permute.xlu0 %366
      %vm368 = vcmask 826368
      %v369 = vsel %vm368, %v361, %v363
      %v370 = vsel %vm368, %v363, %v365
      %v371 = vsel %vm368, %v365, %v367
      %375 = vst [vmem:[#allocation2 + $0xf0] sm:$0xff] %v369
      %376 = vst [vmem:[#allocation2 + $0xf8] sm:$0xff] %v370
      %377 = vst [vmem:[#allocation2 + $0x100] sm:$0xff] %v371
      %378 = vrot.lane.b32.xlu0 %v186, 100
      %v379 = vpop.permute.xlu0 %378
      %380 = vrot.lane.b32.xlu0 %v187, 100
      %v381 = vpop.permute.xlu0 %380
      %382 = vrot.lane.b32.xlu0 %v188, 100
      %v383 = vpop.permute.xlu0 %382
      %384 = vrot.lane.b32.xlu0 %v189, 100
      %v385 = vpop.permute.xlu0 %384
      %vm386 = vcmask 818176
      %v387 = vsel %vm386, %v379, %v381
      %v388 = vsel %vm386, %v381, %v383
      %v389 = vsel %vm386, %v383, %v385
      %393 = vst [vmem:[#allocation2 + $0x108] sm:$0xff] %v387
      %394 = vst [vmem:[#allocation2 + $0x110] sm:$0xff] %v388
      %395 = vst [vmem:[#allocation2 + $0x118] sm:$0xff] %v389
      %396 = vrot.lane.b32.xlu0 %v186, 99
      %v397 = vpop.permute.xlu0 %396
      %398 = vrot.lane.b32.xlu0 %v187, 99
      %v399 = vpop.permute.xlu0 %398
      %400 = vrot.lane.b32.xlu0 %v188, 99
      %v401 = vpop.permute.xlu0 %400
      %402 = vrot.lane.b32.xlu0 %v189, 99
      %v403 = vpop.permute.xlu0 %402
      %vm404 = vcmask 809984
      %v405 = vsel %vm404, %v397, %v399
      %v406 = vsel %vm404, %v399, %v401
      %v407 = vsel %vm404, %v401, %v403
      %411 = vst [vmem:[#allocation2 + $0x120] sm:$0xff] %v405
      %412 = vst [vmem:[#allocation2 + $0x128] sm:$0xff] %v406
      %413 = vst [vmem:[#allocation2 + $0x130] sm:$0xff] %v407
      %414 = vrot.lane.b32.xlu0 %v186, 98
      %v415 = vpop.permute.xlu0 %414
      %416 = vrot.lane.b32.xlu0 %v187, 98
      %v417 = vpop.permute.xlu0 %416
      %418 = vrot.lane.b32.xlu0 %v188, 98
      %v419 = vpop.permute.xlu0 %418
      %420 = vrot.lane.b32.xlu0 %v189, 98
      %v421 = vpop.permute.xlu0 %420
      %vm422 = vcmask 801792
      %v423 = vsel %vm422, %v415, %v417
      %v424 = vsel %vm422, %v417, %v419
      %v425 = vsel %vm422, %v419, %v421
      %429 = vst [vmem:[#allocation2 + $0x138] sm:$0xff] %v423
      %430 = vst [vmem:[#allocation2 + $0x140] sm:$0xff] %v424
      %431 = vst [vmem:[#allocation2 + $0x148] sm:$0xff] %v425
      %432 = vrot.lane.b32.xlu0 %v186, 80
      %v433 = vpop.permute.xlu0 %432
      %434 = vrot.lane.b32.xlu0 %v187, 80
      %v435 = vpop.permute.xlu0 %434
      %436 = vrot.lane.b32.xlu0 %v188, 80
      %v437 = vpop.permute.xlu0 %436
      %438 = vrot.lane.b32.xlu0 %v189, 80
      %v439 = vpop.permute.xlu0 %438
      %vm440 = vcmask 654336
      %v441 = vsel %vm440, %v433, %v435
      %v442 = vsel %vm440, %v435, %v437
      %v443 = vsel %vm440, %v437, %v439
      %447 = vst [vmem:[#allocation2 + $0x150] sm:$0xff] %v441
      %448 = vst [vmem:[#allocation2 + $0x158] sm:$0xff] %v442
      %449 = vst [vmem:[#allocation2 + $0x160] sm:$0xff] %v443
      %450 = vrot.lane.b32.xlu0 %v186, 79
      %v451 = vpop.permute.xlu0 %450
      %452 = vrot.lane.b32.xlu0 %v187, 79
      %v453 = vpop.permute.xlu0 %452
      %454 = vrot.lane.b32.xlu0 %v188, 79
      %v455 = vpop.permute.xlu0 %454
      %456 = vrot.lane.b32.xlu0 %v189, 79
      %v457 = vpop.permute.xlu0 %456
      %vm458 = vcmask 646144
      %v459 = vsel %vm458, %v451, %v453
      %v460 = vsel %vm458, %v453, %v455
      %v461 = vsel %vm458, %v455, %v457
      %465 = vst [vmem:[#allocation2 + $0x168] sm:$0xff] %v459
      %466 = vst [vmem:[#allocation2 + $0x170] sm:$0xff] %v460
      %467 = vst [vmem:[#allocation2 + $0x178] sm:$0xff] %v461
      %468 = vrot.lane.b32.xlu0 %v186, 78
      %v469 = vpop.permute.xlu0 %468
      %470 = vrot.lane.b32.xlu0 %v187, 78
      %v471 = vpop.permute.xlu0 %470
      %472 = vrot.lane.b32.xlu0 %v188, 78
      %v473 = vpop.permute.xlu0 %472
      %474 = vrot.lane.b32.xlu0 %v189, 78
      %v475 = vpop.permute.xlu0 %474
      %vm476 = vcmask 637952
      %v477 = vsel %vm476, %v469, %v471
      %v478 = vsel %vm476, %v471, %v473
      %v479 = vsel %vm476, %v473, %v475
      %483 = vst [vmem:[#allocation2 + $0x180] sm:$0xff] %v477
      %484 = vst [vmem:[#allocation2 + $0x188] sm:$0xff] %v478
      %485 = vst [vmem:[#allocation2 + $0x190] sm:$0xff] %v479
      %486 = vrot.lane.b32.xlu0 %v186, 77
      %v487 = vpop.permute.xlu0 %486
      %488 = vrot.lane.b32.xlu0 %v187, 77
      %v489 = vpop.permute.xlu0 %488
      %490 = vrot.lane.b32.xlu0 %v188, 77
      %v491 = vpop.permute.xlu0 %490
      %492 = vrot.lane.b32.xlu0 %v189, 77
      %v493 = vpop.permute.xlu0 %492
      %vm494 = vcmask 629760
      %v495 = vsel %vm494, %v487, %v489
      %v496 = vsel %vm494, %v489, %v491
      %v497 = vsel %vm494, %v491, %v493
      %501 = vst [vmem:[#allocation2 + $0x198] sm:$0xff] %v495
      %502 = vst [vmem:[#allocation2 + $0x1a0] sm:$0xff] %v496
      %503 = vst [vmem:[#allocation2 + $0x1a8] sm:$0xff] %v497
      %504 = vrot.lane.b32.xlu0 %v186, 76
      %v505 = vpop.permute.xlu0 %504
      %506 = vrot.lane.b32.xlu0 %v187, 76
      %v507 = vpop.permute.xlu0 %506
      %508 = vrot.lane.b32.xlu0 %v188, 76
      %v509 = vpop.permute.xlu0 %508
      %510 = vrot.lane.b32.xlu0 %v189, 76
      %v511 = vpop.permute.xlu0 %510
      %vm512 = vcmask 621568
      %v513 = vsel %vm512, %v505, %v507
      %v514 = vsel %vm512, %v507, %v509
      %v515 = vsel %vm512, %v509, %v511
      %519 = vst [vmem:[#allocation2 + $0x1b0] sm:$0xff] %v513
      %520 = vst [vmem:[#allocation2 + $0x1b8] sm:$0xff] %v514
      %521 = vst [vmem:[#allocation2 + $0x1c0] sm:$0xff] %v515
      %522 = vrot.lane.b32.xlu0 %v186, 75
      %v523 = vpop.permute.xlu0 %522
      %524 = vrot.lane.b32.xlu0 %v187, 75
      %v525 = vpop.permute.xlu0 %524
      %526 = vrot.lane.b32.xlu0 %v188, 75
      %v527 = vpop.permute.xlu0 %526
      %528 = vrot.lane.b32.xlu0 %v189, 75
      %v529 = vpop.permute.xlu0 %528
      %vm530 = vcmask 613376
      %v531 = vsel %vm530, %v523, %v525
      %v532 = vsel %vm530, %v525, %v527
      %v533 = vsel %vm530, %v527, %v529
      %537 = vst [vmem:[#allocation2 + $0x1c8] sm:$0xff] %v531
      %538 = vst [vmem:[#allocation2 + $0x1d0] sm:$0xff] %v532
      %539 = vst [vmem:[#allocation2 + $0x1d8] sm:$0xff] %v533
      %540 = vrot.lane.b32.xlu0 %v186, 74
      %v541 = vpop.permute.xlu0 %540
      %542 = vrot.lane.b32.xlu0 %v187, 74
      %v543 = vpop.permute.xlu0 %542
      %544 = vrot.lane.b32.xlu0 %v188, 74
      %v545 = vpop.permute.xlu0 %544
      %546 = vrot.lane.b32.xlu0 %v189, 74
      %v547 = vpop.permute.xlu0 %546
      %vm548 = vcmask 605184
      %v549 = vsel %vm548, %v541, %v543
      %v550 = vsel %vm548, %v543, %v545
      %v551 = vsel %vm548, %v545, %v547
      %555 = vst [vmem:[#allocation2 + $0x1e0] sm:$0xff] %v549
      %556 = vst [vmem:[#allocation2 + $0x1e8] sm:$0xff] %v550
      %557 = vst [vmem:[#allocation2 + $0x1f0] sm:$0xff] %v551
      %558 = vrot.lane.b32.xlu0 %v186, 56
      %v559 = vpop.permute.xlu0 %558
      %560 = vrot.lane.b32.xlu0 %v187, 56
      %v561 = vpop.permute.xlu0 %560
      %562 = vrot.lane.b32.xlu0 %v188, 56
      %v563 = vpop.permute.xlu0 %562
      %564 = vrot.lane.b32.xlu0 %v189, 56
      %v565 = vpop.permute.xlu0 %564
      %vm566 = vcmask 457728
      %v567 = vsel %vm566, %v559, %v561
      %v568 = vsel %vm566, %v561, %v563
      %v569 = vsel %vm566, %v563, %v565
      %573 = vst [vmem:[#allocation2 + $0x1f8] sm:$0xff] %v567
      %574 = vst [vmem:[#allocation2 + $0x200] sm:$0xff] %v568
      %575 = vst [vmem:[#allocation2 + $0x208] sm:$0xff] %v569
      %576 = vrot.lane.b32.xlu0 %v186, 55
      %v577 = vpop.permute.xlu0 %576
      %578 = vrot.lane.b32.xlu0 %v187, 55
      %v579 = vpop.permute.xlu0 %578
      %580 = vrot.lane.b32.xlu0 %v188, 55
      %v581 = vpop.permute.xlu0 %580
      %582 = vrot.lane.b32.xlu0 %v189, 55
      %v583 = vpop.permute.xlu0 %582
      %vm584 = vcmask 449536
      %v585 = vsel %vm584, %v577, %v579
      %v586 = vsel %vm584, %v579, %v581
      %v587 = vsel %vm584, %v581, %v583
      %591 = vst [vmem:[#allocation2 + $0x210] sm:$0xff] %v585
      %592 = vst [vmem:[#allocation2 + $0x218] sm:$0xff] %v586
      %593 = vst [vmem:[#allocation2 + $0x220] sm:$0xff] %v587
      %594 = vrot.lane.b32.xlu0 %v186, 54
      %v595 = vpop.permute.xlu0 %594
      %596 = vrot.lane.b32.xlu0 %v187, 54
      %v597 = vpop.permute.xlu0 %596
      %598 = vrot.lane.b32.xlu0 %v188, 54
      %v599 = vpop.permute.xlu0 %598
      %600 = vrot.lane.b32.xlu0 %v189, 54
      %v601 = vpop.permute.xlu0 %600
      %vm602 = vcmask 441344
      %v603 = vsel %vm602, %v595, %v597
      %v604 = vsel %vm602, %v597, %v599
      %v605 = vsel %vm602, %v599, %v601
      %609 = vst [vmem:[#allocation2 + $0x228] sm:$0xff] %v603
      %610 = vst [vmem:[#allocation2 + $0x230] sm:$0xff] %v604
      %611 = vst [vmem:[#allocation2 + $0x238] sm:$0xff] %v605
      %612 = vrot.lane.b32.xlu0 %v186, 53
      %v613 = vpop.permute.xlu0 %612
      %614 = vrot.lane.b32.xlu0 %v187, 53
      %v615 = vpop.permute.xlu0 %614
      %616 = vrot.lane.b32.xlu0 %v188, 53
      %v617 = vpop.permute.xlu0 %616
      %618 = vrot.lane.b32.xlu0 %v189, 53
      %v619 = vpop.permute.xlu0 %618
      %vm620 = vcmask 433152
      %v621 = vsel %vm620, %v613, %v615
      %v622 = vsel %vm620, %v615, %v617
      %v623 = vsel %vm620, %v617, %v619
      %627 = vst [vmem:[#allocation2 + $0x240] sm:$0xff] %v621
      %628 = vst [vmem:[#allocation2 + $0x248] sm:$0xff] %v622
      %629 = vst [vmem:[#allocation2 + $0x250] sm:$0xff] %v623
      %630 = vrot.lane.b32.xlu0 %v186, 52
      %v631 = vpop.permute.xlu0 %630
      %632 = vrot.lane.b32.xlu0 %v187, 52
      %v633 = vpop.permute.xlu0 %632
      %634 = vrot.lane.b32.xlu0 %v188, 52
      %v635 = vpop.permute.xlu0 %634
      %636 = vrot.lane.b32.xlu0 %v189, 52
      %v637 = vpop.permute.xlu0 %636
      %vm638 = vcmask 424960
      %v639 = vsel %vm638, %v631, %v633
      %v640 = vsel %vm638, %v633, %v635
      %v641 = vsel %vm638, %v635, %v637
      %645 = vst [vmem:[#allocation2 + $0x258] sm:$0xff] %v639
      %646 = vst [vmem:[#allocation2 + $0x260] sm:$0xff] %v640
      %647 = vst [vmem:[#allocation2 + $0x268] sm:$0xff] %v641
      %648 = vrot.lane.b32.xlu0 %v186, 51
      %v649 = vpop.permute.xlu0 %648
      %650 = vrot.lane.b32.xlu0 %v187, 51
      %v651 = vpop.permute.xlu0 %650
      %652 = vrot.lane.b32.xlu0 %v188, 51
      %v653 = vpop.permute.xlu0 %652
      %654 = vrot.lane.b32.xlu0 %v189, 51
      %v655 = vpop.permute.xlu0 %654
      %vm656 = vcmask 416768
      %v657 = vsel %vm656, %v649, %v651
      %v658 = vsel %vm656, %v651, %v653
      %v659 = vsel %vm656, %v653, %v655
      %663 = vst [vmem:[#allocation2 + $0x270] sm:$0xff] %v657
      %664 = vst [vmem:[#allocation2 + $0x278] sm:$0xff] %v658
      %665 = vst [vmem:[#allocation2 + $0x280] sm:$0xff] %v659
      %666 = vrot.lane.b32.xlu0 %v186, 50
      %v667 = vpop.permute.xlu0 %666
      %668 = vrot.lane.b32.xlu0 %v187, 50
      %v669 = vpop.permute.xlu0 %668
      %670 = vrot.lane.b32.xlu0 %v188, 50
      %v671 = vpop.permute.xlu0 %670
      %672 = vrot.lane.b32.xlu0 %v189, 50
      %v673 = vpop.permute.xlu0 %672
      %vm674 = vcmask 408576
      %v675 = vsel %vm674, %v667, %v669
      %v676 = vsel %vm674, %v669, %v671
      %v677 = vsel %vm674, %v671, %v673
      %681 = vst [vmem:[#allocation2 + $0x288] sm:$0xff] %v675
      %682 = vst [vmem:[#allocation2 + $0x290] sm:$0xff] %v676
      %683 = vst [vmem:[#allocation2 + $0x298] sm:$0xff] %v677
      %684 = vrot.lane.b32.xlu0 %v186, 32
      %v685 = vpop.permute.xlu0 %684
      %686 = vrot.lane.b32.xlu0 %v187, 32
      %v687 = vpop.permute.xlu0 %686
      %688 = vrot.lane.b32.xlu0 %v188, 32
      %v689 = vpop.permute.xlu0 %688
      %690 = vrot.lane.b32.xlu0 %v189, 32
      %v691 = vpop.permute.xlu0 %690
      %vm692 = vcmask 261120
      %v693 = vsel %vm692, %v685, %v687
      %v694 = vsel %vm692, %v687, %v689
      %v695 = vsel %vm692, %v689, %v691
      %699 = vst [vmem:[#allocation2 + $0x2a0] sm:$0xff] %v693
      %700 = vst [vmem:[#allocation2 + $0x2a8] sm:$0xff] %v694
      %701 = vst [vmem:[#allocation2 + $0x2b0] sm:$0xff] %v695
      %702 = vrot.lane.b32.xlu0 %v186, 31
      %v703 = vpop.permute.xlu0 %702
      %704 = vrot.lane.b32.xlu0 %v187, 31
      %v705 = vpop.permute.xlu0 %704
      %706 = vrot.lane.b32.xlu0 %v188, 31
      %v707 = vpop.permute.xlu0 %706
      %708 = vrot.lane.b32.xlu0 %v189, 31
      %v709 = vpop.permute.xlu0 %708
      %vm710 = vcmask 252928
      %v711 = vsel %vm710, %v703, %v705
      %v712 = vsel %vm710, %v705, %v707
      %v713 = vsel %vm710, %v707, %v709
      %717 = vst [vmem:[#allocation2 + $0x2b8] sm:$0xff] %v711
      %718 = vst [vmem:[#allocation2 + $0x2c0] sm:$0xff] %v712
      %719 = vst [vmem:[#allocation2 + $0x2c8] sm:$0xff] %v713
      %720 = vrot.lane.b32.xlu0 %v186, 30
      %v721 = vpop.permute.xlu0 %720
      %722 = vrot.lane.b32.xlu0 %v187, 30
      %v723 = vpop.permute.xlu0 %722
      %724 = vrot.lane.b32.xlu0 %v188, 30
      %v725 = vpop.permute.xlu0 %724
      %726 = vrot.lane.b32.xlu0 %v189, 30
      %v727 = vpop.permute.xlu0 %726
      %vm728 = vcmask 244736
      %v729 = vsel %vm728, %v721, %v723
      %v730 = vsel %vm728, %v723, %v725
      %v731 = vsel %vm728, %v725, %v727
      %735 = vst [vmem:[#allocation2 + $0x2d0] sm:$0xff] %v729
      %736 = vst [vmem:[#allocation2 + $0x2d8] sm:$0xff] %v730
      %737 = vst [vmem:[#allocation2 + $0x2e0] sm:$0xff] %v731
      %738 = vrot.lane.b32.xlu0 %v186, 29
      %v739 = vpop.permute.xlu0 %738
      %740 = vrot.lane.b32.xlu0 %v187, 29
      %v741 = vpop.permute.xlu0 %740
      %742 = vrot.lane.b32.xlu0 %v188, 29
      %v743 = vpop.permute.xlu0 %742
      %744 = vrot.lane.b32.xlu0 %v189, 29
      %v745 = vpop.permute.xlu0 %744
      %vm746 = vcmask 236544
      %v747 = vsel %vm746, %v739, %v741
      %v748 = vsel %vm746, %v741, %v743
      %v749 = vsel %vm746, %v743, %v745
      %753 = vst [vmem:[#allocation2 + $0x2e8] sm:$0xff] %v747
      %754 = vst [vmem:[#allocation2 + $0x2f0] sm:$0xff] %v748
      %755 = vst [vmem:[#allocation2 + $0x2f8] sm:$0xff] %v749
      %756 = vrot.lane.b32.xlu0 %v186, 28
      %v757 = vpop.permute.xlu0 %756
      %758 = vrot.lane.b32.xlu0 %v187, 28
      %v759 = vpop.permute.xlu0 %758
      %760 = vrot.lane.b32.xlu0 %v188, 28
      %v761 = vpop.permute.xlu0 %760
      %762 = vrot.lane.b32.xlu0 %v189, 28
      %v763 = vpop.permute.xlu0 %762
      %vm764 = vcmask 228352
      %v765 = vsel %vm764, %v757, %v759
      %v766 = vsel %vm764, %v759, %v761
      %v767 = vsel %vm764, %v761, %v763
      %771 = vst [vmem:[#allocation2 + $0x300] sm:$0xff] %v765
      %772 = vst [vmem:[#allocation2 + $0x308] sm:$0xff] %v766
      %773 = vst [vmem:[#allocation2 + $0x310] sm:$0xff] %v767
      %774 = vrot.lane.b32.xlu0 %v186, 27
      %v775 = vpop.permute.xlu0 %774
      %776 = vrot.lane.b32.xlu0 %v187, 27
      %v777 = vpop.permute.xlu0 %776
      %778 = vrot.lane.b32.xlu0 %v188, 27
      %v779 = vpop.permute.xlu0 %778
      %780 = vrot.lane.b32.xlu0 %v189, 27
      %v781 = vpop.permute.xlu0 %780
      %vm782 = vcmask 220160
      %v783 = vsel %vm782, %v775, %v777
      %v784 = vsel %vm782, %v777, %v779
      %v785 = vsel %vm782, %v779, %v781
      %789 = vst [vmem:[#allocation2 + $0x318] sm:$0xff] %v783
      %790 = vst [vmem:[#allocation2 + $0x320] sm:$0xff] %v784
      %791 = vst [vmem:[#allocation2 + $0x328] sm:$0xff] %v785
      %792 = vrot.lane.b32.xlu0 %v186, 26
      %v793 = vpop.permute.xlu0 %792
      %794 = vrot.lane.b32.xlu0 %v187, 26
      %v795 = vpop.permute.xlu0 %794
      %796 = vrot.lane.b32.xlu0 %v188, 26
      %v797 = vpop.permute.xlu0 %796
      %798 = vrot.lane.b32.xlu0 %v189, 26
      %v799 = vpop.permute.xlu0 %798
      %vm800 = vcmask 211968
      %v801 = vsel %vm800, %v793, %v795
      %v802 = vsel %vm800, %v795, %v797
      %v803 = vsel %vm800, %v797, %v799
      %807 = vst [vmem:[#allocation2 + $0x330] sm:$0xff] %v801
      %808 = vst [vmem:[#allocation2 + $0x338] sm:$0xff] %v802
      %809 = vst [vmem:[#allocation2 + $0x340] sm:$0xff] %v803
      %810 = vrot.lane.b32.xlu0 %v186, 8
      %v811 = vpop.permute.xlu0 %810
      %812 = vrot.lane.b32.xlu0 %v187, 8
      %v813 = vpop.permute.xlu0 %812
      %814 = vrot.lane.b32.xlu0 %v188, 8
      %v815 = vpop.permute.xlu0 %814
      %816 = vrot.lane.b32.xlu0 %v189, 8
      %v817 = vpop.permute.xlu0 %816
      %vm818 = vcmask 64512
      %v819 = vsel %vm818, %v811, %v813
      %v820 = vsel %vm818, %v813, %v815
      %v821 = vsel %vm818, %v815, %v817
      %825 = vst [vmem:[#allocation2 + $0x348] sm:$0xff] %v819
      %826 = vst [vmem:[#allocation2 + $0x350] sm:$0xff] %v820
      %827 = vst [vmem:[#allocation2 + $0x358] sm:$0xff] %v821
      %828 = vrot.lane.b32.xlu0 %v186, 7
      %v829 = vpop.permute.xlu0 %828
      %830 = vrot.lane.b32.xlu0 %v187, 7
      %v831 = vpop.permute.xlu0 %830
      %832 = vrot.lane.b32.xlu0 %v188, 7
      %v833 = vpop.permute.xlu0 %832
      %834 = vrot.lane.b32.xlu0 %v189, 7
      %v835 = vpop.permute.xlu0 %834
      %vm836 = vcmask 56320
      %v837 = vsel %vm836, %v829, %v831
      %v838 = vsel %vm836, %v831, %v833
      %v839 = vsel %vm836, %v833, %v835
      %843 = vst [vmem:[#allocation2 + $0x360] sm:$0xff] %v837
      %844 = vst [vmem:[#allocation2 + $0x368] sm:$0xff] %v838
      %845 = vst [vmem:[#allocation2 + $0x370] sm:$0xff] %v839
      %846 = vrot.lane.b32.xlu0 %v186, 6
      %v847 = vpop.permute.xlu0 %846
      %848 = vrot.lane.b32.xlu0 %v187, 6
      %v849 = vpop.permute.xlu0 %848
      %850 = vrot.lane.b32.xlu0 %v188, 6
      %v851 = vpop.permute.xlu0 %850
      %852 = vrot.lane.b32.xlu0 %v189, 6
      %v853 = vpop.permute.xlu0 %852
      %vm854 = vcmask 48128
      %v855 = vsel %vm854, %v847, %v849
      %v856 = vsel %vm854, %v849, %v851
      %v857 = vsel %vm854, %v851, %v853
      %861 = vst [vmem:[#allocation2 + $0x378] sm:$0xff] %v855
      %862 = vst [vmem:[#allocation2 + $0x380] sm:$0xff] %v856
      %863 = vst [vmem:[#allocation2 + $0x388] sm:$0xff] %v857
      %864 = vrot.lane.b32.xlu0 %v186, 5
      %v865 = vpop.permute.xlu0 %864
      %866 = vrot.lane.b32.xlu0 %v187, 5
      %v867 = vpop.permute.xlu0 %866
      %868 = vrot.lane.b32.xlu0 %v188, 5
      %v869 = vpop.permute.xlu0 %868
      %870 = vrot.lane.b32.xlu0 %v189, 5
      %v871 = vpop.permute.xlu0 %870
      %vm872 = vcmask 39936
      %v873 = vsel %vm872, %v865, %v867
      %v874 = vsel %vm872, %v867, %v869
      %v875 = vsel %vm872, %v869, %v871
      %879 = vst [vmem:[#allocation2 + $0x390] sm:$0xff] %v873
      %880 = vst [vmem:[#allocation2 + $0x398] sm:$0xff] %v874
      %881 = vst [vmem:[#allocation2 + $0x3a0] sm:$0xff] %v875
      %882 = vrot.lane.b32.xlu0 %v186, 4
      %v883 = vpop.permute.xlu0 %882
      %884 = vrot.lane.b32.xlu0 %v187, 4
      %v885 = vpop.permute.xlu0 %884
      %886 = vrot.lane.b32.xlu0 %v188, 4
      %v887 = vpop.permute.xlu0 %886
      %888 = vrot.lane.b32.xlu0 %v189, 4
      %v889 = vpop.permute.xlu0 %888
      %vm890 = vcmask 31744
      %v891 = vsel %vm890, %v883, %v885
      %v892 = vsel %vm890, %v885, %v887
      %v893 = vsel %vm890, %v887, %v889
      %897 = vst [vmem:[#allocation2 + $0x3a8] sm:$0xff] %v891
      %898 = vst [vmem:[#allocation2 + $0x3b0] sm:$0xff] %v892
      %899 = vst [vmem:[#allocation2 + $0x3b8] sm:$0xff] %v893
      %900 = vrot.lane.b32.xlu0 %v186, 3
      %v901 = vpop.permute.xlu0 %900
      %902 = vrot.lane.b32.xlu0 %v187, 3
      %v903 = vpop.permute.xlu0 %902
      %904 = vrot.lane.b32.xlu0 %v188, 3
      %v905 = vpop.permute.xlu0 %904
      %906 = vrot.lane.b32.xlu0 %v189, 3
      %v907 = vpop.permute.xlu0 %906
      %vm908 = vcmask 23552
      %v909 = vsel %vm908, %v901, %v903
      %v910 = vsel %vm908, %v903, %v905
      %v911 = vsel %vm908, %v905, %v907
      %915 = vst [vmem:[#allocation2 + $0x3c0] sm:$0xff] %v909
      %916 = vst [vmem:[#allocation2 + $0x3c8] sm:$0xff] %v910
      %917 = vst [vmem:[#allocation2 + $0x3d0] sm:$0xff] %v911
      %918 = vrot.lane.b32.xlu0 %v186, 2
      %v919 = vpop.permute.xlu0 %918
      %920 = vrot.lane.b32.xlu0 %v187, 2
      %v921 = vpop.permute.xlu0 %920
      %922 = vrot.lane.b32.xlu0 %v188, 2
      %v923 = vpop.permute.xlu0 %922
      %924 = vrot.lane.b32.xlu0 %v189, 2
      %v925 = vpop.permute.xlu0 %924
      %vm926 = vcmask 15360
      %v927 = vsel %vm926, %v919, %v921
      %v928 = vsel %vm926, %v921, %v923
      %v929 = vsel %vm926, %v923, %v925
      %933 = vst [vmem:[#allocation2 + $0x3d8] sm:$0xff] %v927
      %934 = vst [vmem:[#allocation2 + $0x3e0] sm:$0xff] %v928
      %935 = vst [vmem:[#allocation2 + $0x3e8] sm:$0xff] %v929
      %937 = vrot.lane.b32.xlu0 %v187, 112
      %v938 = vpop.permute.xlu0 %937
      %939 = vrot.lane.b32.xlu0 %v188, 112
      %v940 = vpop.permute.xlu0 %939
      %941 = vrot.lane.b32.xlu0 %v189, 112
      %v942 = vpop.permute.xlu0 %941
      %943 = vrot.lane.b32.xlu0 %v190, 112
      %v944 = vpop.permute.xlu0 %943
      %vm945 = vcmask 916480
      %v946 = vsel %vm945, %v938, %v940
      %v947 = vsel %vm945, %v940, %v942
      %v948 = vsel %vm945, %v942, %v944
      %952 = vst [vmem:[#allocation2 + $0x3f0] sm:$0xff] %v946
      %953 = vst [vmem:[#allocation2 + $0x3f8] sm:$0xff] %v947
      %954 = vst [vmem:[#allocation2 + $0x400] sm:$0xff] %v948
      %955 = vrot.lane.b32.xlu0 %v187, 111
      %v956 = vpop.permute.xlu0 %955
      %957 = vrot.lane.b32.xlu0 %v188, 111
      %v958 = vpop.permute.xlu0 %957
      %959 = vrot.lane.b32.xlu0 %v189, 111
      %v960 = vpop.permute.xlu0 %959
      %961 = vrot.lane.b32.xlu0 %v190, 111
      %v962 = vpop.permute.xlu0 %961
      %vm963 = vcmask 908288
      %v964 = vsel %vm963, %v956, %v958
      %v965 = vsel %vm963, %v958, %v960
      %v966 = vsel %vm963, %v960, %v962
      %970 = vst [vmem:[#allocation2 + $0x408] sm:$0xff] %v964
      %971 = vst [vmem:[#allocation2 + $0x410] sm:$0xff] %v965
      %972 = vst [vmem:[#allocation2 + $0x418] sm:$0xff] %v966
      %973 = vrot.lane.b32.xlu0 %v187, 110
      %v974 = vpop.permute.xlu0 %973
      %975 = vrot.lane.b32.xlu0 %v188, 110
      %v976 = vpop.permute.xlu0 %975
      %977 = vrot.lane.b32.xlu0 %v189, 110
      %v978 = vpop.permute.xlu0 %977
      %979 = vrot.lane.b32.xlu0 %v190, 110
      %v980 = vpop.permute.xlu0 %979
      %vm981 = vcmask 900096
      %v982 = vsel %vm981, %v974, %v976
      %v983 = vsel %vm981, %v976, %v978
      %v984 = vsel %vm981, %v978, %v980
      %988 = vst [vmem:[#allocation2 + $0x420] sm:$0xff] %v982
      %989 = vst [vmem:[#allocation2 + $0x428] sm:$0xff] %v983
      %990 = vst [vmem:[#allocation2 + $0x430] sm:$0xff] %v984
      %991 = vrot.lane.b32.xlu0 %v187, 109
      %v992 = vpop.permute.xlu0 %991
      %993 = vrot.lane.b32.xlu0 %v188, 109
      %v994 = vpop.permute.xlu0 %993
      %995 = vrot.lane.b32.xlu0 %v189, 109
      %v996 = vpop.permute.xlu0 %995
      %997 = vrot.lane.b32.xlu0 %v190, 109
      %v998 = vpop.permute.xlu0 %997
      %vm999 = vcmask 891904
      %v1000 = vsel %vm999, %v992, %v994
      %v1001 = vsel %vm999, %v994, %v996
      %v1002 = vsel %vm999, %v996, %v998
      %1006 = vst [vmem:[#allocation2 + $0x438] sm:$0xff] %v1000
      %1007 = vst [vmem:[#allocation2 + $0x440] sm:$0xff] %v1001
      %1008 = vst [vmem:[#allocation2 + $0x448] sm:$0xff] %v1002
      %1009 = vrot.lane.b32.xlu0 %v187, 108
      %v1010 = vpop.permute.xlu0 %1009
      %1011 = vrot.lane.b32.xlu0 %v188, 108
      %v1012 = vpop.permute.xlu0 %1011
      %1013 = vrot.lane.b32.xlu0 %v189, 108
      %v1014 = vpop.permute.xlu0 %1013
      %1015 = vrot.lane.b32.xlu0 %v190, 108
      %v1016 = vpop.permute.xlu0 %1015
      %vm1017 = vcmask 883712
      %v1018 = vsel %vm1017, %v1010, %v1012
      %v1019 = vsel %vm1017, %v1012, %v1014
      %v1020 = vsel %vm1017, %v1014, %v1016
      %1024 = vst [vmem:[#allocation2 + $0x450] sm:$0xff] %v1018
      %1025 = vst [vmem:[#allocation2 + $0x458] sm:$0xff] %v1019
      %1026 = vst [vmem:[#allocation2 + $0x460] sm:$0xff] %v1020
      %1027 = vrot.lane.b32.xlu0 %v187, 107
      %v1028 = vpop.permute.xlu0 %1027
      %1029 = vrot.lane.b32.xlu0 %v188, 107
      %v1030 = vpop.permute.xlu0 %1029
      %1031 = vrot.lane.b32.xlu0 %v189, 107
      %v1032 = vpop.permute.xlu0 %1031
      %1033 = vrot.lane.b32.xlu0 %v190, 107
      %v1034 = vpop.permute.xlu0 %1033
      %vm1035 = vcmask 875520
      %v1036 = vsel %vm1035, %v1028, %v1030
      %v1037 = vsel %vm1035, %v1030, %v1032
      %v1038 = vsel %vm1035, %v1032, %v1034
      %1042 = vst [vmem:[#allocation2 + $0x468] sm:$0xff] %v1036
      %1043 = vst [vmem:[#allocation2 + $0x470] sm:$0xff] %v1037
      %1044 = vst [vmem:[#allocation2 + $0x478] sm:$0xff] %v1038
      %1045 = vrot.lane.b32.xlu0 %v187, 106
      %v1046 = vpop.permute.xlu0 %1045
      %1047 = vrot.lane.b32.xlu0 %v188, 106
      %v1048 = vpop.permute.xlu0 %1047
      %1049 = vrot.lane.b32.xlu0 %v189, 106
      %v1050 = vpop.permute.xlu0 %1049
      %1051 = vrot.lane.b32.xlu0 %v190, 106
      %v1052 = vpop.permute.xlu0 %1051
      %vm1053 = vcmask 867328
      %v1054 = vsel %vm1053, %v1046, %v1048
      %v1055 = vsel %vm1053, %v1048, %v1050
      %v1056 = vsel %vm1053, %v1050, %v1052
      %1060 = vst [vmem:[#allocation2 + $0x480] sm:$0xff] %v1054
      %1061 = vst [vmem:[#allocation2 + $0x488] sm:$0xff] %v1055
      %1062 = vst [vmem:[#allocation2 + $0x490] sm:$0xff] %v1056
      %v1063 = vld [vmem:[#allocation2] sm:$0xff]
      %v1064 = vld [vmem:[#allocation2 + $0x8] sm:$0xff]
      %v1065 = vld [vmem:[#allocation2 + $0x10] sm:$0xff]
      %v1066 = vld [vmem:[#allocation2 + $0x18] sm:$0xff]
      %v1067 = vld [vmem:[#allocation2 + $0x20] sm:$0xff]
      %v1068 = vld [vmem:[#allocation2 + $0x28] sm:$0xff]
      %v1069 = vld [vmem:[#allocation2 + $0x30] sm:$0xff]
      %v1070 = vld [vmem:[#allocation2 + $0x38] sm:$0xff]
      %v1071 = vld [vmem:[#allocation2 + $0x40] sm:$0xff]
      %v1072 = vld [vmem:[#allocation2 + $0x48] sm:$0xff]
      %v1073 = vld [vmem:[#allocation2 + $0x50] sm:$0xff]
      %v1074 = vld [vmem:[#allocation2 + $0x58] sm:$0xff]
      %v1075 = vld [vmem:[#allocation2 + $0x60] sm:$0xff]
      %v1076 = vld [vmem:[#allocation2 + $0x68] sm:$0xff]
      %v1077 = vld [vmem:[#allocation2 + $0x70] sm:$0xff]
      %v1078 = vld [vmem:[#allocation2 + $0x78] sm:$0xff]
      %v1079 = vld [vmem:[#allocation2 + $0x80] sm:$0xff]
      %v1080 = vld [vmem:[#allocation2 + $0x88] sm:$0xff]
      %v1081 = vld [vmem:[#allocation2 + $0x90] sm:$0xff]
      %v1082 = vld [vmem:[#allocation2 + $0x98] sm:$0xff]
      %v1083 = vld [vmem:[#allocation2 + $0xa0] sm:$0xff]
      %v1084 = vld [vmem:[#allocation2 + $0xa8] sm:$0xff]
      %v1085 = vld [vmem:[#allocation2 + $0xb0] sm:$0xff]
      %v1086 = vld [vmem:[#allocation2 + $0xb8] sm:$0xff]
      %v1087 = vld [vmem:[#allocation2 + $0xc0] sm:$0xff]
      %v1088 = vld [vmem:[#allocation2 + $0xc8] sm:$0xff]
      %v1089 = vld [vmem:[#allocation2 + $0xd0] sm:$0xff]
      %v1090 = vld [vmem:[#allocation2 + $0xd8] sm:$0xff]
      %v1091 = vld [vmem:[#allocation2 + $0xe0] sm:$0xff]
      %v1092 = vld [vmem:[#allocation2 + $0xe8] sm:$0xff]
      %v1093 = vld [vmem:[#allocation2 + $0xf0] sm:$0xff]
      %v1094 = vld [vmem:[#allocation2 + $0xf8] sm:$0xff]
      %v1095 = vld [vmem:[#allocation2 + $0x100] sm:$0xff]
      %v1096 = vld [vmem:[#allocation2 + $0x108] sm:$0xff]
      %v1097 = vld [vmem:[#allocation2 + $0x110] sm:$0xff]
      %v1098 = vld [vmem:[#allocation2 + $0x118] sm:$0xff]
      %v1099 = vld [vmem:[#allocation2 + $0x120] sm:$0xff]
      %v1100 = vld [vmem:[#allocation2 + $0x128] sm:$0xff]
      %v1101 = vld [vmem:[#allocation2 + $0x130] sm:$0xff]
      %v1102 = vld [vmem:[#allocation2 + $0x138] sm:$0xff]
      %v1103 = vld [vmem:[#allocation2 + $0x140] sm:$0xff]
      %v1104 = vld [vmem:[#allocation2 + $0x148] sm:$0xff]
      %v1105 = vld [vmem:[#allocation2 + $0x150] sm:$0xff]
      %v1106 = vld [vmem:[#allocation2 + $0x158] sm:$0xff]
      %v1107 = vld [vmem:[#allocation2 + $0x160] sm:$0xff]
      %v1108 = vld [vmem:[#allocation2 + $0x168] sm:$0xff]
      %v1109 = vld [vmem:[#allocation2 + $0x170] sm:$0xff]
      %v1110 = vld [vmem:[#allocation2 + $0x178] sm:$0xff]
      %v1111 = vld [vmem:[#allocation2 + $0x180] sm:$0xff]
      %v1112 = vld [vmem:[#allocation2 + $0x188] sm:$0xff]
      %v1113 = vld [vmem:[#allocation2 + $0x190] sm:$0xff]
      %v1114 = vld [vmem:[#allocation2 + $0x198] sm:$0xff]
      %v1115 = vld [vmem:[#allocation2 + $0x1a0] sm:$0xff]
      %v1116 = vld [vmem:[#allocation2 + $0x1a8] sm:$0xff]
      %v1117 = vld [vmem:[#allocation2 + $0x1b0] sm:$0xff]
      %v1118 = vld [vmem:[#allocation2 + $0x1b8] sm:$0xff]
      %v1119 = vld [vmem:[#allocation2 + $0x1c0] sm:$0xff]
      %v1120 = vld [vmem:[#allocation2 + $0x1c8] sm:$0xff]
      %v1121 = vld [vmem:[#allocation2 + $0x1d0] sm:$0xff]
      %v1122 = vld [vmem:[#allocation2 + $0x1d8] sm:$0xff]
      %v1123 = vld [vmem:[#allocation2 + $0x1e0] sm:$0xff]
      %v1124 = vld [vmem:[#allocation2 + $0x1e8] sm:$0xff]
      %v1125 = vld [vmem:[#allocation2 + $0x1f0] sm:$0xff]
      %v1126 = vld [vmem:[#allocation2 + $0x1f8] sm:$0xff]
      %v1127 = vld [vmem:[#allocation2 + $0x200] sm:$0xff]
      %v1128 = vld [vmem:[#allocation2 + $0x208] sm:$0xff]
      %v1129 = vld [vmem:[#allocation2 + $0x210] sm:$0xff]
      %v1130 = vld [vmem:[#allocation2 + $0x218] sm:$0xff]
      %v1131 = vld [vmem:[#allocation2 + $0x220] sm:$0xff]
      %v1132 = vld [vmem:[#allocation2 + $0x228] sm:$0xff]
      %v1133 = vld [vmem:[#allocation2 + $0x230] sm:$0xff]
      %v1134 = vld [vmem:[#allocation2 + $0x238] sm:$0xff]
      %v1135 = vld [vmem:[#allocation2 + $0x240] sm:$0xff]
      %v1136 = vld [vmem:[#allocation2 + $0x248] sm:$0xff]
      %v1137 = vld [vmem:[#allocation2 + $0x250] sm:$0xff]
      %v1138 = vld [vmem:[#allocation2 + $0x258] sm:$0xff]
      %v1139 = vld [vmem:[#allocation2 + $0x260] sm:$0xff]
      %v1140 = vld [vmem:[#allocation2 + $0x268] sm:$0xff]
      %v1141 = vld [vmem:[#allocation2 + $0x270] sm:$0xff]
      %v1142 = vld [vmem:[#allocation2 + $0x278] sm:$0xff]
      %v1143 = vld [vmem:[#allocation2 + $0x280] sm:$0xff]
      %v1144 = vld [vmem:[#allocation2 + $0x288] sm:$0xff]
      %v1145 = vld [vmem:[#allocation2 + $0x290] sm:$0xff]
      %v1146 = vld [vmem:[#allocation2 + $0x298] sm:$0xff]
      %v1147 = vld [vmem:[#allocation2 + $0x2a0] sm:$0xff]
      %v1148 = vld [vmem:[#allocation2 + $0x2a8] sm:$0xff]
      %v1149 = vld [vmem:[#allocation2 + $0x2b0] sm:$0xff]
      %v1150 = vld [vmem:[#allocation2 + $0x2b8] sm:$0xff]
      %v1151 = vld [vmem:[#allocation2 + $0x2c0] sm:$0xff]
      %v1152 = vld [vmem:[#allocation2 + $0x2c8] sm:$0xff]
      %v1153 = vld [vmem:[#allocation2 + $0x2d0] sm:$0xff]
      %v1154 = vld [vmem:[#allocation2 + $0x2d8] sm:$0xff]
      %v1155 = vld [vmem:[#allocation2 + $0x2e0] sm:$0xff]
      %v1156 = vld [vmem:[#allocation2 + $0x2e8] sm:$0xff]
      %v1157 = vld [vmem:[#allocation2 + $0x2f0] sm:$0xff]
      %v1158 = vld [vmem:[#allocation2 + $0x2f8] sm:$0xff]
      %v1159 = vld [vmem:[#allocation2 + $0x300] sm:$0xff]
      %v1160 = vld [vmem:[#allocation2 + $0x308] sm:$0xff]
      %v1161 = vld [vmem:[#allocation2 + $0x310] sm:$0xff]
      %v1162 = vld [vmem:[#allocation2 + $0x318] sm:$0xff]
      %v1163 = vld [vmem:[#allocation2 + $0x320] sm:$0xff]
      %v1164 = vld [vmem:[#allocation2 + $0x328] sm:$0xff]
      %v1165 = vld [vmem:[#allocation2 + $0x330] sm:$0xff]
      %v1166 = vld [vmem:[#allocation2 + $0x338] sm:$0xff]
      %v1167 = vld [vmem:[#allocation2 + $0x340] sm:$0xff]
      %v1168 = vld [vmem:[#allocation2 + $0x348] sm:$0xff]
      %v1169 = vld [vmem:[#allocation2 + $0x350] sm:$0xff]
      %v1170 = vld [vmem:[#allocation2 + $0x358] sm:$0xff]
      %v1171 = vld [vmem:[#allocation2 + $0x360] sm:$0xff]
      %v1172 = vld [vmem:[#allocation2 + $0x368] sm:$0xff]
      %v1173 = vld [vmem:[#allocation2 + $0x370] sm:$0xff]
      %v1174 = vld [vmem:[#allocation2 + $0x378] sm:$0xff]
      %v1175 = vld [vmem:[#allocation2 + $0x380] sm:$0xff]
      %v1176 = vld [vmem:[#allocation2 + $0x388] sm:$0xff]
      %v1177 = vld [vmem:[#allocation2 + $0x390] sm:$0xff]
      %v1178 = vld [vmem:[#allocation2 + $0x398] sm:$0xff]
      %v1179 = vld [vmem:[#allocation2 + $0x3a0] sm:$0xff]
      %v1180 = vld [vmem:[#allocation2 + $0x3a8] sm:$0xff]
      %v1181 = vld [vmem:[#allocation2 + $0x3b0] sm:$0xff]
      %v1182 = vld [vmem:[#allocation2 + $0x3b8] sm:$0xff]
      %v1183 = vld [vmem:[#allocation2 + $0x3c0] sm:$0xff]
      %v1184 = vld [vmem:[#allocation2 + $0x3c8] sm:$0xff]
      %v1185 = vld [vmem:[#allocation2 + $0x3d0] sm:$0xff]
      %v1186 = vld [vmem:[#allocation2 + $0x3d8] sm:$0xff]
      %v1187 = vld [vmem:[#allocation2 + $0x3e0] sm:$0xff]
      %v1188 = vld [vmem:[#allocation2 + $0x3e8] sm:$0xff]
      %v1189 = vld [vmem:[#allocation2 + $0x3f0] sm:$0xff]
      %v1190 = vld [vmem:[#allocation2 + $0x3f8] sm:$0xff]
      %v1191 = vld [vmem:[#allocation2 + $0x400] sm:$0xff]
      %v1192 = vld [vmem:[#allocation2 + $0x408] sm:$0xff]
      %v1193 = vld [vmem:[#allocation2 + $0x410] sm:$0xff]
      %v1194 = vld [vmem:[#allocation2 + $0x418] sm:$0xff]
      %v1195 = vld [vmem:[#allocation2 + $0x420] sm:$0xff]
      %v1196 = vld [vmem:[#allocation2 + $0x428] sm:$0xff]
      %v1197 = vld [vmem:[#allocation2 + $0x430] sm:$0xff]
      %v1198 = vld [vmem:[#allocation2 + $0x438] sm:$0xff]
      %v1199 = vld [vmem:[#allocation2 + $0x440] sm:$0xff]
      %v1200 = vld [vmem:[#allocation2 + $0x448] sm:$0xff]
      %v1201 = vld [vmem:[#allocation2 + $0x450] sm:$0xff]
      %v1202 = vld [vmem:[#allocation2 + $0x458] sm:$0xff]
      %v1203 = vld [vmem:[#allocation2 + $0x460] sm:$0xff]
      %v1204 = vld [vmem:[#allocation2 + $0x468] sm:$0xff]
      %v1205 = vld [vmem:[#allocation2 + $0x470] sm:$0xff]
      %v1206 = vld [vmem:[#allocation2 + $0x478] sm:$0xff]
      %v1207 = vld [vmem:[#allocation2 + $0x480] sm:$0xff]
      %v1208 = vld [vmem:[#allocation2 + $0x488] sm:$0xff]
      %v1209 = vld [vmem:[#allocation2 + $0x490] sm:$0xff]
      %1211 = vset.pattern.permute.xlu0 0
      %1212 = vperm.xlu0 %1211, %v183
      %v1213 = vpop.permute.xlu0 %1212
      %1216 = vset.pattern.permute.xlu0 0
      %1217 = vperm.xlu0 %1216, %v184
      %v1218 = vpop.permute.xlu0 %1217
      %1221 = vset.pattern.permute.xlu0 0
      %1222 = vperm.xlu0 %1221, %v185
      %v1223 = vpop.permute.xlu0 %1222
      %v1226 = vsel %vm818, %v174, 0
      %v1229 = vsel %vm818, %v178, 0
      %v1232 = vsel %vm818, %v182, 0
      %1234 = vmatprep.subr.mxu0 %v1109
      %1235 = vmatpush1.msra.mxu0 %v1108
      %1236 = vmatprep.subr.mxu0 %v1106
      %1237 = vmatpush1.msra.mxu0 %v1105
      %1238 = vmatprep.subr.mxu0 %v1103
      %1239 = vmatpush1.msra.mxu0 %v1102
      %1240 = vmatprep.subr.mxu0 %v1100
      %1241 = vmatpush1.msra.mxu0 %v1099
      %1242 = vmatprep.subr.mxu0 %v1097
      %1243 = vmatpush1.msra.mxu0 %v1096
      %1244 = vmatprep.subr.mxu0 %v1094
      %1245 = vmatpush1.msra.mxu0 %v1093
      %1246 = vmatprep.subr.mxu0 %v1091
      %1247 = vmatpush1.msra.mxu0 %v1090
      %1248 = vmatprep.subr.mxu0 %v1088
      %1249 = vmatpush1.msra.mxu0 %v1087
      %1250 = vmatprep.subr.mxu0 %v1085
      %1251 = vmatpush1.msra.mxu0 %v1084
      %1252 = vmatprep.subr.mxu0 %v1082
      %1253 = vmatpush1.msra.mxu0 %v1081
      %1254 = vmatprep.subr.mxu0 %v1079
      %1255 = vmatpush1.msra.mxu0 %v1078
      %1256 = vmatprep.subr.mxu0 %v1076
      %1257 = vmatpush1.msra.mxu0 %v1075
      %1258 = vmatprep.subr.mxu0 %v1073
      %1259 = vmatpush1.msra.mxu0 %v1072
      %1260 = vmatprep.subr.mxu0 %v1070
      %1261 = vmatpush1.msra.mxu0 %v1069
      %1262 = vmatprep.subr.mxu0 %v1067
      %1263 = vmatpush1.msra.mxu0 %v1066
      %1264 = vmatprep.subr.mxu0 %v1064
      %1265 = vmatpush1.msra.mxu0 %v1063
      %1266 = vmatprep.subr.mxu0 %v1157
      %1267 = vmatpush2.msra.mxu0 %v1156
      %1268 = vmatprep.subr.mxu0 %v1154
      %1269 = vmatpush2.msra.mxu0 %v1153
      %1270 = vmatprep.subr.mxu0 %v1151
      %1271 = vmatpush2.msra.mxu0 %v1150
      %1272 = vmatprep.subr.mxu0 %v1148
      %1273 = vmatpush2.msra.mxu0 %v1147
      %1274 = vmatprep.subr.mxu0 %v1145
      %1275 = vmatpush2.msra.mxu0 %v1144
      %1276 = vmatprep.subr.mxu0 %v1142
      %1277 = vmatpush2.msra.mxu0 %v1141
      %1278 = vmatprep.subr.mxu0 %v1139
      %1279 = vmatpush2.msra.mxu0 %v1138
      %1280 = vmatprep.subr.mxu0 %v1136
      %1281 = vmatpush2.msra.mxu0 %v1135
      %1282 = vmatprep.subr.mxu0 %v1133
      %1283 = vmatpush2.msra.mxu0 %v1132
      %1284 = vmatprep.subr.mxu0 %v1130
      %1285 = vmatpush2.msra.mxu0 %v1129
      %1286 = vmatprep.subr.mxu0 %v1127
      %1287 = vmatpush2.msra.mxu0 %v1126
      %1288 = vmatprep.subr.mxu0 %v1124
      %1289 = vmatpush2.msra.mxu0 %v1123
      %1290 = vmatprep.subr.mxu0 %v1121
      %1291 = vmatpush2.msra.mxu0 %v1120
      %1292 = vmatprep.subr.mxu0 %v1118
      %1293 = vmatpush2.msra.mxu0 %v1117
      %1294 = vmatprep.subr.mxu0 %v1115
      %1295 = vmatpush2.msra.mxu0 %v1114
      %1296 = vmatprep.subr.mxu0 %v1112
      %1297 = vmatpush2.msra.mxu0 %v1111
      %1298 = vmatprep.mubr.f32.mxu0 %v172
      %1299 = vmatmul.mubr.f32.gmra.mxu0 %v171
      %v1300 = vpop.f32.mrf.mxu0
      %v1301 = vadd.f32 %v1213, %v1300
      %v1302 = vpop.f32.mrf.mxu0
      %v1303 = vadd.f32 %v1213, %v1302
      %1304 = vmatprep.mubr.f32.mxu0 %v176
      %1305 = vmatmul.mubr.f32.gmra.mxu0 %v175
      %v1306 = vpop.f32.mrf.mxu0
      %v1307 = vadd.f32 %v1218, %v1306
      %v1308 = vpop.f32.mrf.mxu0
      %v1309 = vadd.f32 %v1218, %v1308
      %1310 = vmatprep.mubr.f32.mxu0 %v180
      %1311 = vmatmul.mubr.f32.gmra.mxu0 %v179
      %v1312 = vpop.f32.mrf.mxu0
      %v1313 = vadd.f32 %v1223, %v1312
      %v1314 = vpop.f32.mrf.mxu0
      %v1315 = vadd.f32 %v1223, %v1314
      %1316 = vdwg.mxu0
      %1317 = vmatprep.subr.mxu0 %v1205
      %1318 = vmatpush1.msra.mxu0 %v1204
      %1319 = vmatprep.subr.mxu0 %v1202
      %1320 = vmatpush1.msra.mxu0 %v1201
      %1321 = vmatprep.subr.mxu0 %v1199
      %1322 = vmatpush1.msra.mxu0 %v1198
      %1323 = vmatprep.subr.mxu0 %v1196
      %1324 = vmatpush1.msra.mxu0 %v1195
      %1325 = vmatprep.subr.mxu0 %v1193
      %1326 = vmatpush1.msra.mxu0 %v1192
      %1327 = vmatprep.subr.mxu0 %v1190
      %1328 = vmatpush1.msra.mxu0 %v1189
      %1329 = vmatprep.subr.mxu0 %v1187
      %1330 = vmatpush1.msra.mxu0 %v1186
      %1331 = vmatprep.subr.mxu0 %v1184
      %1332 = vmatpush1.msra.mxu0 %v1183
      %1333 = vmatprep.subr.mxu0 %v1181
      %1334 = vmatpush1.msra.mxu0 %v1180
      %1335 = vmatprep.subr.mxu0 %v1178
      %1336 = vmatpush1.msra.mxu0 %v1177
      %1337 = vmatprep.subr.mxu0 %v1175
      %1338 = vmatpush1.msra.mxu0 %v1174
      %1339 = vmatprep.subr.mxu0 %v1172
      %1340 = vmatpush1.msra.mxu0 %v1171
      %1341 = vmatprep.subr.mxu0 %v1169
      %1342 = vmatpush1.msra.mxu0 %v1168
      %1343 = vmatprep.subr.mxu0 %v1166
      %1344 = vmatpush1.msra.mxu0 %v1165
      %1345 = vmatprep.subr.mxu0 %v1163
      %1346 = vmatpush1.msra.mxu0 %v1162
      %1347 = vmatprep.subr.mxu0 %v1160
      %1348 = vmatpush1.msra.mxu0 %v1159
      %1349 = vmatprep.subr.mxu0 0.0
      %1350 = vmatpush2.msra.mxu0 0.0
      %1351 = vmatprep.subr.mxu0 0.0
      %1352 = vmatpush2.msra.mxu0 0.0
      %1353 = vmatprep.subr.mxu0 0.0
      %1354 = vmatpush2.msra.mxu0 0.0
      %1355 = vmatprep.subr.mxu0 0.0
      %1356 = vmatpush2.msra.mxu0 0.0
      %1357 = vmatprep.subr.mxu0 0.0
      %1358 = vmatpush2.msra.mxu0 0.0
      %1359 = vmatprep.subr.mxu0 0.0
      %1360 = vmatpush2.msra.mxu0 0.0
      %1361 = vmatprep.subr.mxu0 0.0
      %1362 = vmatpush2.msra.mxu0 0.0
      %1363 = vmatprep.subr.mxu0 0.0
      %1364 = vmatpush2.msra.mxu0 0.0
      %1365 = vmatprep.subr.mxu0 0.0
      %1366 = vmatpush2.msra.mxu0 0.0
      %1367 = vmatprep.subr.mxu0 0.0
      %1368 = vmatpush2.msra.mxu0 0.0
      %1369 = vmatprep.subr.mxu0 0.0
      %1370 = vmatpush2.msra.mxu0 0.0
      %1371 = vmatprep.subr.mxu0 0.0
      %1372 = vmatpush2.msra.mxu0 0.0
      %1373 = vmatprep.subr.mxu0 0.0
      %1374 = vmatpush2.msra.mxu0 0.0
      %1375 = vmatprep.subr.mxu0 0.0
      %1376 = vmatpush2.msra.mxu0 0.0
      %1377 = vmatprep.subr.mxu0 0.0
      %1378 = vmatpush2.msra.mxu0 0.0
      %1379 = vmatprep.subr.mxu0 %v1208
      %1380 = vmatpush2.msra.mxu0 %v1207
      %1381 = vmatprep.mubr.f32.mxu0 %v1226
      %1382 = vmatmul.mubr.f32.gmra.mxu0 %v173
      %v1383 = vpop.f32.mrf.mxu0
      %v1384 = vadd.f32 %v1301, %v1383
      %v1385 = vpop.f32.mrf.mxu0
      %v1386 = vadd.f32 %v1303, %v1385
      %1387 = vmatprep.mubr.f32.mxu0 %v1229
      %1388 = vmatmul.mubr.f32.gmra.mxu0 %v177
      %v1389 = vpop.f32.mrf.mxu0
      %v1390 = vadd.f32 %v1307, %v1389
      %v1391 = vpop.f32.mrf.mxu0
      %v1392 = vadd.f32 %v1309, %v1391
      %1393 = vmatprep.mubr.f32.mxu0 %v1232
      %1394 = vmatmul.mubr.f32.gmra.mxu0 %v181
      %v1395 = vpop.f32.mrf.mxu0
      %v1396 = vadd.f32 %v1313, %v1395
      %v1397 = vpop.f32.mrf.mxu0
      %v1398 = vadd.f32 %v1315, %v1397
      %1399 = vdwg.mxu0
      %1400 = vmatprep.subr.mxu0 0.0
      %1401 = vmatpush1.msra.mxu0 %v1110
      %1402 = vmatprep.subr.mxu0 0.0
      %1403 = vmatpush1.msra.mxu0 %v1107
      %1404 = vmatprep.subr.mxu0 0.0
      %1405 = vmatpush1.msra.mxu0 %v1104
      %1406 = vmatprep.subr.mxu0 0.0
      %1407 = vmatpush1.msra.mxu0 %v1101
      %1408 = vmatprep.subr.mxu0 0.0
      %1409 = vmatpush1.msra.mxu0 %v1098
      %1410 = vmatprep.subr.mxu0 0.0
      %1411 = vmatpush1.msra.mxu0 %v1095
      %1412 = vmatprep.subr.mxu0 0.0
      %1413 = vmatpush1.msra.mxu0 %v1092
      %1414 = vmatprep.subr.mxu0 0.0
      %1415 = vmatpush1.msra.mxu0 %v1089
      %1416 = vmatprep.subr.mxu0 0.0
      %1417 = vmatpush1.msra.mxu0 %v1086
      %1418 = vmatprep.subr.mxu0 0.0
      %1419 = vmatpush1.msra.mxu0 %v1083
      %1420 = vmatprep.subr.mxu0 0.0
      %1421 = vmatpush1.msra.mxu0 %v1080
      %1422 = vmatprep.subr.mxu0 0.0
      %1423 = vmatpush1.msra.mxu0 %v1077
      %1424 = vmatprep.subr.mxu0 0.0
      %1425 = vmatpush1.msra.mxu0 %v1074
      %1426 = vmatprep.subr.mxu0 0.0
      %1427 = vmatpush1.msra.mxu0 %v1071
      %1428 = vmatprep.subr.mxu0 0.0
      %1429 = vmatpush1.msra.mxu0 %v1068
      %1430 = vmatprep.subr.mxu0 0.0
      %1431 = vmatpush1.msra.mxu0 %v1065
      %1432 = vmatprep.subr.mxu0 0.0
      %1433 = vmatpush2.msra.mxu0 %v1158
      %1434 = vmatprep.subr.mxu0 0.0
      %1435 = vmatpush2.msra.mxu0 %v1155
      %1436 = vmatprep.subr.mxu0 0.0
      %1437 = vmatpush2.msra.mxu0 %v1152
      %1438 = vmatprep.subr.mxu0 0.0
      %1439 = vmatpush2.msra.mxu0 %v1149
      %1440 = vmatprep.subr.mxu0 0.0
      %1441 = vmatpush2.msra.mxu0 %v1146
      %1442 = vmatprep.subr.mxu0 0.0
      %1443 = vmatpush2.msra.mxu0 %v1143
      %1444 = vmatprep.subr.mxu0 0.0
      %1445 = vmatpush2.msra.mxu0 %v1140
      %1446 = vmatprep.subr.mxu0 0.0
      %1447 = vmatpush2.msra.mxu0 %v1137
      %1448 = vmatprep.subr.mxu0 0.0
      %1449 = vmatpush2.msra.mxu0 %v1134
      %1450 = vmatprep.subr.mxu0 0.0
      %1451 = vmatpush2.msra.mxu0 %v1131
      %1452 = vmatprep.subr.mxu0 0.0
      %1453 = vmatpush2.msra.mxu0 %v1128
      %1454 = vmatprep.subr.mxu0 0.0
      %1455 = vmatpush2.msra.mxu0 %v1125
      %1456 = vmatprep.subr.mxu0 0.0
      %1457 = vmatpush2.msra.mxu0 %v1122
      %1458 = vmatprep.subr.mxu0 0.0
      %1459 = vmatpush2.msra.mxu0 %v1119
      %1460 = vmatprep.subr.mxu0 0.0
      %1461 = vmatpush2.msra.mxu0 %v1116
      %1462 = vmatprep.subr.mxu0 0.0
      %1463 = vmatpush2.msra.mxu0 %v1113
      %1464 = vmatprep.mubr.f32.mxu0 %v172
      %1465 = vmatmul.mubr.f32.gmra.mxu0 %v171
      %v1466 = vpop.f32.mrf.mxu0
      %v1467 = vadd.f32 %v1213, %v1466
      %v1468 = vpop.f32.mrf.mxu0
      %1469 = vmatprep.mubr.f32.mxu0 %v176
      %1470 = vmatmul.mubr.f32.gmra.mxu0 %v175
      %v1471 = vpop.f32.mrf.mxu0
      %v1472 = vadd.f32 %v1218, %v1471
      %v1473 = vpop.f32.mrf.mxu0
      %1474 = vmatprep.mubr.f32.mxu0 %v180
      %1475 = vmatmul.mubr.f32.gmra.mxu0 %v179
      %v1476 = vpop.f32.mrf.mxu0
      %v1477 = vadd.f32 %v1223, %v1476
      %v1478 = vpop.f32.mrf.mxu0
      %1479 = vdwg.mxu0
      %1480 = vmatprep.subr.mxu0 0.0
      %1481 = vmatpush1.msra.mxu0 %v1206
      %1482 = vmatprep.subr.mxu0 0.0
      %1483 = vmatpush1.msra.mxu0 %v1203
      %1484 = vmatprep.subr.mxu0 0.0
      %1485 = vmatpush1.msra.mxu0 %v1200
      %1486 = vmatprep.subr.mxu0 0.0
      %1487 = vmatpush1.msra.mxu0 %v1197
      %1488 = vmatprep.subr.mxu0 0.0
      %1489 = vmatpush1.msra.mxu0 %v1194
      %1490 = vmatprep.subr.mxu0 0.0
      %1491 = vmatpush1.msra.mxu0 %v1191
      %1492 = vmatprep.subr.mxu0 0.0
      %1493 = vmatpush1.msra.mxu0 %v1188
      %1494 = vmatprep.subr.mxu0 0.0
      %1495 = vmatpush1.msra.mxu0 %v1185
      %1496 = vmatprep.subr.mxu0 0.0
      %1497 = vmatpush1.msra.mxu0 %v1182
      %1498 = vmatprep.subr.mxu0 0.0
      %1499 = vmatpush1.msra.mxu0 %v1179
      %1500 = vmatprep.subr.mxu0 0.0
      %1501 = vmatpush1.msra.mxu0 %v1176
      %1502 = vmatprep.subr.mxu0 0.0
      %1503 = vmatpush1.msra.mxu0 %v1173
      %1504 = vmatprep.subr.mxu0 0.0
      %1505 = vmatpush1.msra.mxu0 %v1170
      %1506 = vmatprep.subr.mxu0 0.0
      %1507 = vmatpush1.msra.mxu0 %v1167
      %1508 = vmatprep.subr.mxu0 0.0
      %1509 = vmatpush1.msra.mxu0 %v1164
      %1510 = vmatprep.subr.mxu0 0.0
      %1511 = vmatpush1.msra.mxu0 %v1161
      %1512 = vmatprep.subr.mxu0 0.0
      %1513 = vmatpush2.msra.mxu0 0.0
      %1514 = vmatprep.subr.mxu0 0.0
      %1515 = vmatpush2.msra.mxu0 0.0
      %1516 = vmatprep.subr.mxu0 0.0
      %1517 = vmatpush2.msra.mxu0 0.0
      %1518 = vmatprep.subr.mxu0 0.0
      %1519 = vmatpush2.msra.mxu0 0.0
      %1520 = vmatprep.subr.mxu0 0.0
      %1521 = vmatpush2.msra.mxu0 0.0
      %1522 = vmatprep.subr.mxu0 0.0
      %1523 = vmatpush2.msra.mxu0 0.0
      %1524 = vmatprep.subr.mxu0 0.0
      %1525 = vmatpush2.msra.mxu0 0.0
      %1526 = vmatprep.subr.mxu0 0.0
      %1527 = vmatpush2.msra.mxu0 0.0
      %1528 = vmatprep.subr.mxu0 0.0
      %1529 = vmatpush2.msra.mxu0 0.0
      %1530 = vmatprep.subr.mxu0 0.0
      %1531 = vmatpush2.msra.mxu0 0.0
      %1532 = vmatprep.subr.mxu0 0.0
      %1533 = vmatpush2.msra.mxu0 0.0
      %1534 = vmatprep.subr.mxu0 0.0
      %1535 = vmatpush2.msra.mxu0 0.0
      %1536 = vmatprep.subr.mxu0 0.0
      %1537 = vmatpush2.msra.mxu0 0.0
      %1538 = vmatprep.subr.mxu0 0.0
      %1539 = vmatpush2.msra.mxu0 0.0
      %1540 = vmatprep.subr.mxu0 0.0
      %1541 = vmatpush2.msra.mxu0 0.0
      %1542 = vmatprep.subr.mxu0 0.0
      %1543 = vmatpush2.msra.mxu0 %v1209
      %1544 = vmatprep.mubr.f32.mxu0 %v1226
      %1545 = vmatmul.mubr.f32.gmra.mxu0 %v173
      %v1546 = vpop.f32.mrf.mxu0
      %v1547 = vadd.f32 %v1467, %v1546
      %v1548 = vpop.f32.mrf.mxu0
      %1549 = vmatprep.mubr.f32.mxu0 %v1229
      %1550 = vmatmul.mubr.f32.gmra.mxu0 %v177
      %v1551 = vpop.f32.mrf.mxu0
      %v1552 = vadd.f32 %v1472, %v1551
      %v1553 = vpop.f32.mrf.mxu0
      %1554 = vmatprep.mubr.f32.mxu0 %v1232
      %1555 = vmatmul.mubr.f32.gmra.mxu0 %v181
      %v1556 = vpop.f32.mrf.mxu0
      %v1557 = vadd.f32 %v1477, %v1556
      %v1558 = vpop.f32.mrf.mxu0
      %1559 = vdwg.mxu0
      %v1560 = vmax.f32 %v1384, 0.0
      %v1561 = vmax.f32 %v1386, 0.0
      %v1562 = vmax.f32 %v1547, 0.0
      %v1563 = vmax.f32 %v1390, 0.0
      %v1564 = vmax.f32 %v1392, 0.0
      %v1565 = vmax.f32 %v1552, 0.0
      %v1566 = vadd.f32 %v1560, %v1563
      %v1567 = vadd.f32 %v1561, %v1564
      %v1568 = vadd.f32 %v1562, %v1565
      %v1569 = vmax.f32 %v1396, 0.0
      %v1570 = vmax.f32 %v1398, 0.0
      %v1571 = vmax.f32 %v1557, 0.0
      %v1572 = vadd.f32 %v1566, %v1569
      %v1573 = vadd.f32 %v1567, %v1570
      %v1574 = vadd.f32 %v1568, %v1571
      %1575 = vst [vmem:[%s170] sm:$0xff] %v1572
      %1576 = vst [vmem:[%s170 + $0x8] sm:$0xff] %v1573
      %1577 = vst [vmem:[%s170 + $0x10] sm:$0xff] %v1574
      %p1578 = scmp.lt.s32.totalorder %s14, 1
      %s1579 = scalar_select %p1578, %s14, 1
      %s1580 = smul.addr %s1579, 3
      %s1581 = smul.addr %s1580, 8
      %s1582 = scalar_lea.vmem %s3, %s1581
      // Predicated region
      $region33: #{multi_scale_feature_extractor.1} parent=31 // pred_check
        %p1583 = pneg %p100
      $region34: #{multi_scale_feature_extractor.1} parent=31 // pred_check_branch
        %1585 = sbr.rel (%p1583) target = $region36
      $region35: #{multi_scale_feature_extractor.1} parent=31 // pred_region
        _
      $region36: #{multi_scale_feature_extractor.1} parent=31 // pred_fallthru
        _
    $region32: #{multi_scale_feature_extractor.1} parent=5 // pred_fallthru
      _
    %p1586 = scmp.le.s32.totalorder 2, %s9
    // Predicated region
    $region37: #{multi_scale_feature_extractor.1} parent=5 // pred_check
      %p1587 = pneg %p1586
    $region38: #{multi_scale_feature_extractor.1} parent=5 // pred_check_branch
      %1589 = sbr.rel (%p1587) target = $region40
    $region39: #{multi_scale_feature_extractor.1} parent=5 // pred_region
      %s1590 = ssub.s32 %s9, 2
      // Predicated region
      $region41: #{multi_scale_feature_extractor.1} parent=39 // pred_check
        %p1591 = pneg %p106
      $region42: #{multi_scale_feature_extractor.1} parent=39 // pred_check_branch
        %1593 = sbr.rel (%p1591) target = $region44
      $region43: #{multi_scale_feature_extractor.1} parent=39 // pred_region
        %p1594 = scmp.lt.s32.totalorder %s15, 1
        %s1595 = scalar_select %p1594, %s15, 1
        %s1596 = smul.addr %s1595, 3
        %s1597 = smul.addr %s1596, 8
        %s1598 = scalar_lea.vmem %s3, %s1597
      $region44: #{multi_scale_feature_extractor.1} parent=39 // pred_fallthru
        _
    $region40: #{multi_scale_feature_extractor.1} parent=5 // pred_fallthru
      _
  $region6: #{multi_scale_feature_extractor.1} parent=0 // loop_footer
    %s13 = sadd.s32 1, %s9
  $region7: #{multi_scale_feature_extractor.1} parent=0 // loop_footer_branch
    %8 = sbr.rel target = $region3
  $region8: #{multi_scale_feature_extractor.1} parent=0 // loop_exit
    _

</llo_original>
